<compile_context>
chip_gen: v7x
topology: tpu7x:2x2x1
jax: 0.10.0
libtpu: 0.0.40
codegen_flags: <defaults>
</compile_context>

<pallas_src>
import functools

import jax
import jax.numpy as jnp
from jax import lax
from jax.experimental import pallas as pl
from jax.experimental.pallas import tpu as pltpu

BN_EPS = 1e-05


def _fused_kernel(x_ref, wa_ref, sa_ref, ba_ref, wb_ref, sb_ref, bb_ref,
                  o_ref, mid_ref, *, stride, ho, wo):
    """Fused 3x3(stride)+BN+ReLU+3x3+BN for one image.

    x_ref  : (s*s, Hs, Ws, Cin)    phase-split zero-padded input (compute dtype)
    wa_ref : (9*Cin,  Cmid)        conv-a weight, contraction index = (dh,dw,cin)
    wb_ref : (9*Cmid, Cmid)        conv-b weight
    sa/ba/sb/bb : (1, Cmid) f32    folded BatchNorm scale / bias
    o_ref  : (ho*wo, Cmid) f32     2-D output slab
    mid_ref: (ho+2, wo+2, Cmid) f32 VMEM scratch (zero-padded intermediate)
    """
    s = stride
    cin = x_ref.shape[-1]
    cmid = wa_ref.shape[-1]
    cdt = wa_ref.dtype

    # ---- conv a: build the (ho*wo, 9*cin) patch in VMEM, single matmul ----
    taps = []
    for dh in range(3):
        for dw in range(3):
            ph = (dh % s) * s + (dw % s)          # phase plane holding this tap
            r0, c0 = dh // s, dw // s             # static shift inside the plane
            taps.append(
                x_ref[ph, r0:r0 + ho, c0:c0 + wo, :].astype(jnp.float32))
    patch_a = jnp.concatenate(taps, axis=-1)      # (ho, wo, 9*cin) f32
    patch_a = patch_a.reshape(ho * wo, 9 * cin).astype(cdt)
    ya = jnp.dot(patch_a, wa_ref[...], preferred_element_type=jnp.float32)
    ya = jnp.maximum(ya * sa_ref[...] + ba_ref[...], 0.0)   # BN (folded) + ReLU

    # ---- stage zero-padded intermediate in VMEM; never touches HBM ----
    mid_ref[...] = jnp.zeros_like(mid_ref)
    mid_ref[1:ho + 1, 1:wo + 1, :] = ya.reshape(ho, wo, cmid)

    # ---- conv b (stride 1): same single-matmul scheme over the scratch ----
    taps = []
    for dh in range(3):
        for dw in range(3):
            taps.append(mid_ref[dh:dh + ho, dw:dw + wo, :])
    patch_b = jnp.concatenate(taps, axis=-1)      # (ho, wo, 9*cmid) f32
    patch_b = patch_b.reshape(ho * wo, 9 * cmid).astype(cdt)
    yb = jnp.dot(patch_b, wb_ref[...], preferred_element_type=jnp.float32)
    o_ref[...] = (yb * sb_ref[...] + bb_ref[...]).astype(o_ref.dtype)


def _phase_split(xp, s):
    """Pure rearrangement (no replication) of a padded NHWC image into s*s phases.

    xp: (N, Hp, Wp, C) -> (N, s*s, ceil(Hp/s), ceil(Ws/s), C) with
    out[n, ph*s + pw, i, j, c] == xp[n, i*s + ph, j*s + pw, c] (zero tail pad,
    never read by any tap)."""
    n, hp, wp, c = xp.shape
    hs = -(-hp // s)
    ws = -(-wp // s)
    xp = jnp.pad(xp, ((0, 0), (0, hs * s - hp), (0, ws * s - wp), (0, 0)))
    x = xp.reshape(n, hs, s, ws, s, c)
    x = jnp.transpose(x, (0, 2, 4, 1, 3, 5))
    return x.reshape(n, s * s, hs, ws, c)


def _fold_bn(gamma, beta, mean, var):
    scale = gamma / jnp.sqrt(var + BN_EPS)
    return scale, beta - mean * scale


def basic_transform_forward(x_nchw, params, *, stride,
                            compute_dtype=jnp.bfloat16):
    """Forward of BasicTransform: 3x3(stride), BN, ReLU, 3x3, BN.  NCHW in / out."""
    n, cin, h, w = x_nchw.shape
    cmid = params["a_w_hwio"].shape[-1]
    ho = (h + 2 - 3) // stride + 1
    wo = (w + 2 - 3) // stride + 1

    x = jnp.transpose(x_nchw, (0, 2, 3, 1))                    # NCHW -> NHWC
    xp = jnp.pad(x, ((0, 0), (1, 1), (1, 1), (0, 0)))
    xph = _phase_split(xp, stride).astype(compute_dtype)       # (N, s*s, Hs, Ws, Cin)
    _, nph, hs, ws, _ = xph.shape

    wa = params["a_w_hwio"].reshape(9 * cin, cmid).astype(compute_dtype)
    wb = params["b_w_hwio"].reshape(9 * cmid, cmid).astype(compute_dtype)
    sa, ba = _fold_bn(params["a_bn_gamma"], params["a_bn_beta"],
                      params["a_bn_mean"], params["a_bn_var"])
    sb, bb = _fold_bn(params["b_bn_gamma"], params["b_bn_beta"],
                      params["b_bn_mean"], params["b_bn_var"])
    sa = sa.reshape(1, cmid).astype(jnp.float32)
    ba = ba.reshape(1, cmid).astype(jnp.float32)
    sb = sb.reshape(1, cmid).astype(jnp.float32)
    bb = bb.reshape(1, cmid).astype(jnp.float32)

    kernel = functools.partial(_fused_kernel, stride=stride, ho=ho, wo=wo)
    out = pl.pallas_call(
        kernel,
        out_shape=jax.ShapeDtypeStruct((n, ho * wo, cmid), jnp.float32),
        grid_spec=pltpu.PrefetchScalarGridSpec(
            num_scalar_prefetch=0,
            grid=(n,),
            in_specs=[
                pl.BlockSpec((None, nph, hs, ws, cin),
                             lambda i: (i, 0, 0, 0, 0)),
                pl.BlockSpec((9 * cin, cmid), lambda i: (0, 0)),
                pl.BlockSpec((1, cmid), lambda i: (0, 0)),
                pl.BlockSpec((1, cmid), lambda i: (0, 0)),
                pl.BlockSpec((9 * cmid, cmid), lambda i: (0, 0)),
                pl.BlockSpec((1, cmid), lambda i: (0, 0)),
                pl.BlockSpec((1, cmid), lambda i: (0, 0)),
            ],
            out_specs=pl.BlockSpec((None, ho * wo, cmid), lambda i: (i, 0, 0)),
            scratch_shapes=[pltpu.VMEM((ho + 2, wo + 2, cmid), jnp.float32)],
        ),
        compiler_params=pltpu.CompilerParams(
            dimension_semantics=("parallel",),
            vmem_limit_bytes=32 * 1024 * 1024,
        ),
    )(xph, wa, sa, ba, wb, sb, bb)

    out = out.reshape(n, ho, wo, cmid)
    return jnp.transpose(out, (0, 3, 1, 2))                    # NHWC -> NCHW


def _ref_forward(x_nchw, params, *, stride, compute_dtype=jnp.bfloat16):
    """Pure-JAX reference (lax.conv) with matching dtype boundaries."""
    def conv_bn(x, w_hwio, g, b, m, v, s, relu):
        y = lax.conv_general_dilated(
            x.astype(compute_dtype), w_hwio.astype(compute_dtype),
            window_strides=(s, s), padding=((1, 1), (1, 1)),
            dimension_numbers=("NHWC", "HWIO", "NHWC"),
            preferred_element_type=jnp.float32)
        scale = g / jnp.sqrt(v + BN_EPS)
        y = y * scale + (b - m * scale)
        return jnp.maximum(y, 0.0) if relu else y

    x = jnp.transpose(x_nchw, (0, 2, 3, 1))
    x = conv_bn(x, params["a_w_hwio"], params["a_bn_gamma"], params["a_bn_beta"],
                params["a_bn_mean"], params["a_bn_var"], stride, True)
    x = conv_bn(x, params["b_w_hwio"], params["b_bn_gamma"], params["b_bn_beta"],
                params["b_bn_mean"], params["b_bn_var"], 1, False)
    return jnp.transpose(x, (0, 3, 1, 2))


def init_params(key, w_in, w_out):
    ks = jax.random.split(key, 10)
    # PyTorch conv weight layout is (Cout, Cin, 3, 3); convert to HWIO.
    w_a = 0.1 * jax.random.normal(ks[0], (w_out, w_in, 3, 3), jnp.float32)
    w_b = 0.1 * jax.random.normal(ks[1], (w_out, w_out, 3, 3), jnp.float32)
    return {
        "a_w_hwio": jnp.transpose(w_a, (2, 3, 1, 0)),
        "a_bn_gamma": 1.0 + 0.1 * jax.random.normal(ks[2], (w_out,), jnp.float32),
        "a_bn_beta": 0.1 * jax.random.normal(ks[3], (w_out,), jnp.float32),
        "a_bn_mean": 0.1 * jax.random.normal(ks[4], (w_out,), jnp.float32),
        "a_bn_var": 1.0 + 0.1 * jax.random.uniform(ks[5], (w_out,), jnp.float32),
        "b_w_hwio": jnp.transpose(w_b, (2, 3, 1, 0)),
        "b_bn_gamma": 1.0 + 0.1 * jax.random.normal(ks[6], (w_out,), jnp.float32),
        "b_bn_beta": 0.1 * jax.random.normal(ks[7], (w_out,), jnp.float32),
        "b_bn_mean": 0.1 * jax.random.normal(ks[8], (w_out,), jnp.float32),
        "b_bn_var": 1.0 + 0.1 * jax.random.uniform(ks[9], (w_out,), jnp.float32),
    }


if __name__ == "__main__":
    key = jax.random.PRNGKey(0)
    k_x, k_p = jax.random.split(key)

    N, W_IN, W_OUT, H, STRIDE = 2, 4, 8, 16, 2
    x = jax.random.normal(k_x, (N, W_IN, H, H), jnp.float32)   # NCHW, like PyTorch
    params = init_params(k_p, W_IN, W_OUT)

    # f32 compute path: tight check of the algorithm against the lax.conv reference.
    out_f32 = jax.block_until_ready(
        basic_transform_forward(x, params, stride=STRIDE,
                                compute_dtype=jnp.float32))
    ref_f32 = jax.block_until_ready(
        _ref_forward(x, params, stride=STRIDE, compute_dtype=jnp.float32))
    assert out_f32.shape == (N, W_OUT, H // STRIDE, H // STRIDE), out_f32.shape
    assert jnp.allclose(out_f32, ref_f32, atol=5e-4, rtol=5e-4), \
        float(jnp.abs(out_f32 - ref_f32).max())

    # bf16 compute path (default; preferred on v6e/v7x): matched-dtype reference.
    out_bf16 = jax.block_until_ready(
        basic_transform_forward(x, params, stride=STRIDE,
                                compute_dtype=jnp.bfloat16))
    ref_bf16 = jax.block_until_ready(
        _ref_forward(x, params, stride=STRIDE, compute_dtype=jnp.bfloat16))
    assert jnp.allclose(out_bf16, ref_bf16, atol=1e-2, rtol=1e-2), \
        float(jnp.abs(out_bf16 - ref_bf16).max())

    print("KERNEL_OK")
</pallas_src>

<mosaic_0001>
module attributes {stable_mosaic.version = 11 : i64} {
  func.func @_fused_kernel(%arg0: i32, %arg1: memref<1x4x9x9x4xf32, #tpu.memory_space<vmem>>, %arg2: memref<36x8xf32, #tpu.memory_space<vmem>>, %arg3: memref<1x8xf32, #tpu.memory_space<vmem>>, %arg4: memref<1x8xf32, #tpu.memory_space<vmem>>, %arg5: memref<72x8xf32, #tpu.memory_space<vmem>>, %arg6: memref<1x8xf32, #tpu.memory_space<vmem>>, %arg7: memref<1x8xf32, #tpu.memory_space<vmem>>, %arg8: memref<1x64x8xf32, #tpu.memory_space<vmem>>, %arg9: memref<10x10x8xf32, #tpu.memory_space<vmem>>) attributes {dimension_semantics = [#tpu.dimension_semantics<parallel>], iteration_bounds = array<i64: 2>, scalar_prefetch = 0 : i64, scratch_operands = 1 : i64, tpu.core_type = #tpu.core_type<tc>, window_params = [{transform_indices = @transform_0, window_bounds = array<i64: 1, 4, 9, 9, 4>}, {pipeline_mode = #tpu.pipeline_mode<synchronous>, transform_indices = @transform_1, window_bounds = array<i64: 36, 8>}, {pipeline_mode = #tpu.pipeline_mode<synchronous>, transform_indices = @transform_2, window_bounds = array<i64: 1, 8>}, {pipeline_mode = #tpu.pipeline_mode<synchronous>, transform_indices = @transform_3, window_bounds = array<i64: 1, 8>}, {pipeline_mode = #tpu.pipeline_mode<synchronous>, transform_indices = @transform_4, window_bounds = array<i64: 72, 8>}, {pipeline_mode = #tpu.pipeline_mode<synchronous>, transform_indices = @transform_5, window_bounds = array<i64: 1, 8>}, {pipeline_mode = #tpu.pipeline_mode<synchronous>, transform_indices = @transform_6, window_bounds = array<i64: 1, 8>}, {transform_indices = @transform_7, window_bounds = array<i64: 1, 64, 8>}]} {
    %c0 = arith.constant 0 : index
    %c0_0 = arith.constant 0 : index
    %c0_1 = arith.constant 0 : index
    %c0_2 = arith.constant 0 : index
    %c0_3 = arith.constant 0 : index
    %0 = vector.load %arg1[%c0, %c0_0, %c0_1, %c0_2, %c0_3] : memref<1x4x9x9x4xf32, #tpu.memory_space<vmem>>, vector<1x1x8x8x4xf32>
    %1 = vector.shape_cast %0 : vector<1x1x8x8x4xf32> to vector<8x8x4xf32>
    %c0_4 = arith.constant 0 : index
    %c1 = arith.constant 1 : index
    %c0_5 = arith.constant 0 : index
    %c0_6 = arith.constant 0 : index
    %c0_7 = arith.constant 0 : index
    %2 = vector.load %arg1[%c0_4, %c1, %c0_5, %c0_6, %c0_7] : memref<1x4x9x9x4xf32, #tpu.memory_space<vmem>>, vector<1x1x8x8x4xf32>
    %3 = vector.shape_cast %2 : vector<1x1x8x8x4xf32> to vector<8x8x4xf32>
    %c0_8 = arith.constant 0 : index
    %c0_9 = arith.constant 0 : index
    %c0_10 = arith.constant 0 : index
    %c1_11 = arith.constant 1 : index
    %c0_12 = arith.constant 0 : index
    %4 = vector.load %arg1[%c0_8, %c0_9, %c0_10, %c1_11, %c0_12] : memref<1x4x9x9x4xf32, #tpu.memory_space<vmem>>, vector<1x1x8x8x4xf32>
    %5 = vector.shape_cast %4 : vector<1x1x8x8x4xf32> to vector<8x8x4xf32>
    %c0_13 = arith.constant 0 : index
    %c2 = arith.constant 2 : index
    %c0_14 = arith.constant 0 : index
    %c0_15 = arith.constant 0 : index
    %c0_16 = arith.constant 0 : index
    %6 = vector.load %arg1[%c0_13, %c2, %c0_14, %c0_15, %c0_16] : memref<1x4x9x9x4xf32, #tpu.memory_space<vmem>>, vector<1x1x8x8x4xf32>
    %7 = vector.shape_cast %6 : vector<1x1x8x8x4xf32> to vector<8x8x4xf32>
    %c0_17 = arith.constant 0 : index
    %c3 = arith.constant 3 : index
    %c0_18 = arith.constant 0 : index
    %c0_19 = arith.constant 0 : index
    %c0_20 = arith.constant 0 : index
    %8 = vector.load %arg1[%c0_17, %c3, %c0_18, %c0_19, %c0_20] : memref<1x4x9x9x4xf32, #tpu.memory_space<vmem>>, vector<1x1x8x8x4xf32>
    %9 = vector.shape_cast %8 : vector<1x1x8x8x4xf32> to vector<8x8x4xf32>
    %c0_21 = arith.constant 0 : index
    %c2_22 = arith.constant 2 : index
    %c0_23 = arith.constant 0 : index
    %c1_24 = arith.constant 1 : index
    %c0_25 = arith.constant 0 : index
    %10 = vector.load %arg1[%c0_21, %c2_22, %c0_23, %c1_24, %c0_25] : memref<1x4x9x9x4xf32, #tpu.memory_space<vmem>>, vector<1x1x8x8x4xf32>
    %11 = vector.shape_cast %10 : vector<1x1x8x8x4xf32> to vector<8x8x4xf32>
    %c0_26 = arith.constant 0 : index
    %c0_27 = arith.constant 0 : index
    %c1_28 = arith.constant 1 : index
    %c0_29 = arith.constant 0 : index
    %c0_30 = arith.constant 0 : index
    %12 = vector.load %arg1[%c0_26, %c0_27, %c1_28, %c0_29, %c0_30] : memref<1x4x9x9x4xf32, #tpu.memory_space<vmem>>, vector<1x1x8x8x4xf32>
    %13 = vector.shape_cast %12 : vector<1x1x8x8x4xf32> to vector<8x8x4xf32>
    %c0_31 = arith.constant 0 : index
    %c1_32 = arith.constant 1 : index
    %c1_33 = arith.constant 1 : index
    %c0_34 = arith.constant 0 : index
    %c0_35 = arith.constant 0 : index
    %14 = vector.load %arg1[%c0_31, %c1_32, %c1_33, %c0_34, %c0_35] : memref<1x4x9x9x4xf32, #tpu.memory_space<vmem>>, vector<1x1x8x8x4xf32>
    %15 = vector.shape_cast %14 : vector<1x1x8x8x4xf32> to vector<8x8x4xf32>
    %c0_36 = arith.constant 0 : index
    %c0_37 = arith.constant 0 : index
    %c1_38 = arith.constant 1 : index
    %c1_39 = arith.constant 1 : index
    %c0_40 = arith.constant 0 : index
    %16 = vector.load %arg1[%c0_36, %c0_37, %c1_38, %c1_39, %c0_40] : memref<1x4x9x9x4xf32, #tpu.memory_space<vmem>>, vector<1x1x8x8x4xf32>
    %17 = vector.shape_cast %16 : vector<1x1x8x8x4xf32> to vector<8x8x4xf32>
    %18 = tpu.concatenate %1, %3, %5, %7, %9, %11, %13, %15, %17 in 2 : vector<8x8x4xf32>, vector<8x8x4xf32>, vector<8x8x4xf32>, vector<8x8x4xf32>, vector<8x8x4xf32>, vector<8x8x4xf32>, vector<8x8x4xf32>, vector<8x8x4xf32>, vector<8x8x4xf32> -> vector<8x8x36xf32>
    %19 = vector.shape_cast %18 : vector<8x8x36xf32> to vector<64x36xf32>
    %c0_41 = arith.constant 0 : index
    %c0_42 = arith.constant 0 : index
    %20 = vector.load %arg2[%c0_41, %c0_42] : memref<36x8xf32, #tpu.memory_space<vmem>>, vector<36x8xf32>
    %cst = arith.constant dense<0.000000e+00> : vector<64x8xf32>
    %21 = tpu.matmul %19, %20, %cst {dimension_numbers = #tpu.dot_dimension_numbers<[1], [0], [0], [1], [0, 0, 1, 1], [], []>} : vector<64x36xf32>, vector<36x8xf32>, vector<64x8xf32> -> vector<64x8xf32>
    %c0_43 = arith.constant 0 : index
    %c0_44 = arith.constant 0 : index
    %22 = vector.load %arg3[%c0_43, %c0_44] : memref<1x8xf32, #tpu.memory_space<vmem>>, vector<1x8xf32>
    %23 = vector.broadcast %22 : vector<1x8xf32> to vector<64x8xf32>
    %24 = arith.mulf %21, %23 : vector<64x8xf32>
    %c0_45 = arith.constant 0 : index
    %c0_46 = arith.constant 0 : index
    %25 = vector.load %arg4[%c0_45, %c0_46] : memref<1x8xf32, #tpu.memory_space<vmem>>, vector<1x8xf32>
    %26 = vector.broadcast %25 : vector<1x8xf32> to vector<64x8xf32>
    %27 = arith.addf %24, %26 : vector<64x8xf32>
    %cst_47 = arith.constant 0.000000e+00 : f32
    %28 = vector.broadcast %cst_47 : f32 to vector<64x8xf32>
    %29 = arith.maximumf %27, %28 : vector<64x8xf32>
    %cst_48 = arith.constant 0.000000e+00 : f32
    %30 = vector.broadcast %cst_48 : f32 to vector<10x10x8xf32>
    %c0_49 = arith.constant 0 : index
    %c0_50 = arith.constant 0 : index
    %c0_51 = arith.constant 0 : index
    %31 = vector.load %arg9[%c0_49, %c0_50, %c0_51] : memref<10x10x8xf32, #tpu.memory_space<vmem>>, vector<10x10x8xf32>
    tpu.vector_store %arg9[%c0_49, %c0_50, %c0_51], %30 {strides = array<i32>} : memref<10x10x8xf32, #tpu.memory_space<vmem>>, vector<10x10x8xf32>,
    %32 = vector.shape_cast %29 : vector<64x8xf32> to vector<8x8x8xf32>
    %c1_52 = arith.constant 1 : index
    %c1_53 = arith.constant 1 : index
    %c0_54 = arith.constant 0 : index
    %33 = vector.load %arg9[%c1_52, %c1_53, %c0_54] : memref<10x10x8xf32, #tpu.memory_space<vmem>>, vector<8x8x8xf32>
    tpu.vector_store %arg9[%c1_52, %c1_53, %c0_54], %32 {strides = array<i32>} : memref<10x10x8xf32, #tpu.memory_space<vmem>>, vector<8x8x8xf32>,
    %c0_55 = arith.constant 0 : index
    %c0_56 = arith.constant 0 : index
    %c0_57 = arith.constant 0 : index
    %34 = vector.load %arg9[%c0_55, %c0_56, %c0_57] : memref<10x10x8xf32, #tpu.memory_space<vmem>>, vector<8x8x8xf32>
    %c0_58 = arith.constant 0 : index
    %c1_59 = arith.constant 1 : index
    %c0_60 = arith.constant 0 : index
    %35 = vector.load %arg9[%c0_58, %c1_59, %c0_60] : memref<10x10x8xf32, #tpu.memory_space<vmem>>, vector<8x8x8xf32>
    %c0_61 = arith.constant 0 : index
    %c2_62 = arith.constant 2 : index
    %c0_63 = arith.constant 0 : index
    %36 = vector.load %arg9[%c0_61, %c2_62, %c0_63] : memref<10x10x8xf32, #tpu.memory_space<vmem>>, vector<8x8x8xf32>
    %c1_64 = arith.constant 1 : index
    %c0_65 = arith.constant 0 : index
    %c0_66 = arith.constant 0 : index
    %37 = vector.load %arg9[%c1_64, %c0_65, %c0_66] : memref<10x10x8xf32, #tpu.memory_space<vmem>>, vector<8x8x8xf32>
    %c1_67 = arith.constant 1 : index
    %c1_68 = arith.constant 1 : index
    %c0_69 = arith.constant 0 : index
    %38 = vector.load %arg9[%c1_67, %c1_68, %c0_69] : memref<10x10x8xf32, #tpu.memory_space<vmem>>, vector<8x8x8xf32>
    %c1_70 = arith.constant 1 : index
    %c2_71 = arith.constant 2 : index
    %c0_72 = arith.constant 0 : index
    %39 = vector.load %arg9[%c1_70, %c2_71, %c0_72] : memref<10x10x8xf32, #tpu.memory_space<vmem>>, vector<8x8x8xf32>
    %c2_73 = arith.constant 2 : index
    %c0_74 = arith.constant 0 : index
    %c0_75 = arith.constant 0 : index
    %40 = vector.load %arg9[%c2_73, %c0_74, %c0_75] : memref<10x10x8xf32, #tpu.memory_space<vmem>>, vector<8x8x8xf32>
    %c2_76 = arith.constant 2 : index
    %c1_77 = arith.constant 1 : index
    %c0_78 = arith.constant 0 : index
    %41 = vector.load %arg9[%c2_76, %c1_77, %c0_78] : memref<10x10x8xf32, #tpu.memory_space<vmem>>, vector<8x8x8xf32>
    %c2_79 = arith.constant 2 : index
    %c2_80 = arith.constant 2 : index
    %c0_81 = arith.constant 0 : index
    %42 = vector.load %arg9[%c2_79, %c2_80, %c0_81] : memref<10x10x8xf32, #tpu.memory_space<vmem>>, vector<8x8x8xf32>
    %43 = tpu.concatenate %34, %35, %36, %37, %38, %39, %40, %41, %42 in 2 : vector<8x8x8xf32>, vector<8x8x8xf32>, vector<8x8x8xf32>, vector<8x8x8xf32>, vector<8x8x8xf32>, vector<8x8x8xf32>, vector<8x8x8xf32>, vector<8x8x8xf32>, vector<8x8x8xf32> -> vector<8x8x72xf32>
    %44 = vector.shape_cast %43 : vector<8x8x72xf32> to vector<64x72xf32>
    %c0_82 = arith.constant 0 : index
    %c0_83 = arith.constant 0 : index
    %45 = vector.load %arg5[%c0_82, %c0_83] : memref<72x8xf32, #tpu.memory_space<vmem>>, vector<72x8xf32>
    %cst_84 = arith.constant dense<0.000000e+00> : vector<64x8xf32>
    %46 = tpu.matmul %44, %45, %cst_84 {dimension_numbers = #tpu.dot_dimension_numbers<[1], [0], [0], [1], [0, 0, 1, 1], [], []>} : vector<64x72xf32>, vector<72x8xf32>, vector<64x8xf32> -> vector<64x8xf32>
    %c0_85 = arith.constant 0 : index
    %c0_86 = arith.constant 0 : index
    %47 = vector.load %arg6[%c0_85, %c0_86] : memref<1x8xf32, #tpu.memory_space<vmem>>, vector<1x8xf32>
    %48 = vector.broadcast %47 : vector<1x8xf32> to vector<64x8xf32>
    %49 = arith.mulf %46, %48 : vector<64x8xf32>
    %c0_87 = arith.constant 0 : index
    %c0_88 = arith.constant 0 : index
    %50 = vector.load %arg7[%c0_87, %c0_88] : memref<1x8xf32, #tpu.memory_space<vmem>>, vector<1x8xf32>
    %51 = vector.broadcast %50 : vector<1x8xf32> to vector<64x8xf32>
    %52 = arith.addf %49, %51 : vector<64x8xf32>
    %c0_89 = arith.constant 0 : index
    %c0_90 = arith.constant 0 : index
    %c0_91 = arith.constant 0 : index
    %53 = vector.load %arg8[%c0_89, %c0_90, %c0_91] : memref<1x64x8xf32, #tpu.memory_space<vmem>>, vector<1x64x8xf32>
    %54 = vector.shape_cast %53 : vector<1x64x8xf32> to vector<64x8xf32>
    %55 = vector.shape_cast %52 : vector<64x8xf32> to vector<1x64x8xf32>
    tpu.vector_store %arg8[%c0_89, %c0_90, %c0_91], %55 {strides = array<i32>} : memref<1x64x8xf32, #tpu.memory_space<vmem>>, vector<1x64x8xf32>,
    return
  }
  func.func @transform_0(%arg0: i32) -> (i32, i32, i32, i32, i32) {
    %c0_i32 = arith.constant 0 : i32
    %c0_i32_0 = arith.constant 0 : i32
    %c0_i32_1 = arith.constant 0 : i32
    %c0_i32_2 = arith.constant 0 : i32
    %c0_i32_3 = arith.constant 0 : i32
    return %arg0, %c0_i32, %c0_i32_0, %c0_i32_1, %c0_i32_2 : i32, i32, i32, i32, i32
  }
  func.func @transform_1(%arg0: i32) -> (i32, i32) {
    %c0_i32 = arith.constant 0 : i32
    %c0_i32_0 = arith.constant 0 : i32
    %c0_i32_1 = arith.constant 0 : i32
    return %c0_i32, %c0_i32_0 : i32, i32
  }
  func.func @transform_2(%arg0: i32) -> (i32, i32) {
    %c0_i32 = arith.constant 0 : i32
    %c0_i32_0 = arith.constant 0 : i32
    %c0_i32_1 = arith.constant 0 : i32
    return %c0_i32, %c0_i32_0 : i32, i32
  }
  func.func @transform_3(%arg0: i32) -> (i32, i32) {
    %c0_i32 = arith.constant 0 : i32
    %c0_i32_0 = arith.constant 0 : i32
    %c0_i32_1 = arith.constant 0 : i32
    return %c0_i32, %c0_i32_0 : i32, i32
  }
  func.func @transform_4(%arg0: i32) -> (i32, i32) {
    %c0_i32 = arith.constant 0 : i32
    %c0_i32_0 = arith.constant 0 : i32
    %c0_i32_1 = arith.constant 0 : i32
    return %c0_i32, %c0_i32_0 : i32, i32
  }
  func.func @transform_5(%arg0: i32) -> (i32, i32) {
    %c0_i32 = arith.constant 0 : i32
    %c0_i32_0 = arith.constant 0 : i32
    %c0_i32_1 = arith.constant 0 : i32
    return %c0_i32, %c0_i32_0 : i32, i32
  }
  func.func @transform_6(%arg0: i32) -> (i32, i32) {
    %c0_i32 = arith.constant 0 : i32
    %c0_i32_0 = arith.constant 0 : i32
    %c0_i32_1 = arith.constant 0 : i32
    return %c0_i32, %c0_i32_0 : i32, i32
  }
  func.func @transform_7(%arg0: i32) -> (i32, i32, i32) {
    %c0_i32 = arith.constant 0 : i32
    %c0_i32_0 = arith.constant 0 : i32
    %c0_i32_1 = arith.constant 0 : i32
    return %arg0, %c0_i32, %c0_i32_0 : i32, i32, i32
  }
}

</mosaic_0001>

<llo_original>
// kernel: tpu_custom_call.1
$region0: #{tpu_custom_call.1}
  #allocation0 [shape = 'u32[]', space=smem, size = 0x4, offset = 0x4, fixed_abs, tag = 'smem constant byte address 0x4 - core index']
  #allocation1 [shape = 'u32[144,128]{1,0:T(1,128)}', space=vmem, size = 0x12000, scoped, tag = 'internal scratch']
  #allocation2 [shape = 'f32[10,10,8]{2,1,0:T(8,128)}', space=vmem, size = 0x14000, scoped, tag = 'scratch operand']
  %s0 = inlined_call_operand.vmem [shape: f32[2,4,9,9,4], index: 0, kind: input, shape index: {}]
  %s1 = inlined_call_operand.vmem [shape: f32[36,8], index: 1, kind: input, shape index: {}]
  %s2 = inlined_call_operand.vmem [shape: f32[1,8], index: 2, kind: input, shape index: {}]
  %s3 = inlined_call_operand.vmem [shape: f32[1,8], index: 3, kind: input, shape index: {}]
  %s4 = inlined_call_operand.vmem [shape: f32[72,8], index: 4, kind: input, shape index: {}]
  %s5 = inlined_call_operand.vmem [shape: f32[1,8], index: 5, kind: input, shape index: {}]
  %s6 = inlined_call_operand.vmem [shape: f32[1,8], index: 6, kind: input, shape index: {}]
  %s7 = inlined_call_operand.vmem [shape: f32[2,64,8], index: 7, kind: output, shape index: {}]
  %s8 = sld [smem:[#allocation0]]
  $region61: #{tpu_custom_call.1} parent=0
    _
  %s10 = ssub.s32 1, %s8
  %s11 = scalar_select 0, %s10, %s8
  loop: start=0, step=1, limit=4
  $region2: #{tpu_custom_call.1} parent=0 // loop_pre_header
    _
  $region3: #{tpu_custom_call.1} parent=0 // loop_header
    %s13 = sphi 0, %s17
    %p14 = scmp.ge.s32.totalorder %s13, 4
    %s23 = sphi 0, %s25
    %s26 = sphi 0, %s23
    %s27 = sphi 0, %s26
    %s43 = sphi 0, %s27
    %s47 = sphi 0, %s47
    %s49 = sphi 0, %s47
    %s50 = sphi 0, %s49
    %s64 = sphi 0, %s50
    %s68 = sphi 0, %s68
    %s70 = sphi 0, %s68
    %s71 = sphi 0, %s70
    %s85 = sphi 0, %s71
    %s89 = sphi 0, %s89
    %s91 = sphi 0, %s89
    %s92 = sphi 0, %s91
    %s106 = sphi 0, %s92
    %s110 = sphi 0, %s110
    %s112 = sphi 0, %s110
    %s113 = sphi 0, %s112
    %s127 = sphi 0, %s113
    %s131 = sphi 0, %s131
    %s133 = sphi 0, %s131
    %s134 = sphi 0, %s133
    %s148 = sphi 0, %s134
    %s152 = sphi 0, %s152
    %s154 = sphi 0, %s152
    %s155 = sphi 0, %s154
    %s169 = sphi 0, %s155
    %s175 = sphi 0, %s177
    %s178 = sphi 0, %s175
    %s179 = sphi 0, %s178
    %s195 = sphi 0, %s179
  $region4: #{tpu_custom_call.1} parent=0 // loop_header_branch
    %16 = sbr.rel (%p14) target = $region8
  $region5: #{tpu_custom_call.1} parent=0 // loop_body
    %s18 = ssub.s32 %s13, 1
    %s19 = ssub.s32 %s13, 2
    %s20 = sadd.s32 %s13, 1
    %s21 = ssub.s32 %s13, %s20
    %p22 = scmp.eq.s32.totalorder %s21, 0
    %s24 = sadd.s32 %s23, 1
    %s25 = scalar_select %p22, %s23, %s24
    %p28 = pneg %p22
    %p29 = scmp.eq.s32.totalorder %s13, 1
    %p30 = por %p28, %p29
    %p31 = scmp.ne.s32.totalorder %s23, %s26
    %p32 = scmp.eq.s32.totalorder %s13, 0
    %p33 = por %p31, %p32
    %p34 = scmp.ne.s32.totalorder %s23, %s26
    %p35 = scmp.eq.s32.totalorder %s18, 1
    %p36 = por %p34, %p35
    %p37 = scmp.ne.s32.totalorder %s26, %s27
    %p38 = scmp.eq.s32.totalorder %s18, 0
    %p39 = por %p37, %p38
    %p40 = scmp.ne.s32.totalorder %s26, %s27
    %p41 = scmp.eq.s32.totalorder %s19, 1
    %p42 = por %p40, %p41
    %p44 = scmp.ne.s32.totalorder %s27, %s43
    %p45 = scmp.eq.s32.totalorder %s19, 0
    %p46 = por %p44, %p45
    %s48 = sadd.s32 %s47, 1
    %p51 = scmp.eq.s32.totalorder %s13, 1
    %p52 = scmp.ne.s32.totalorder %s47, %s49
    %p53 = scmp.eq.s32.totalorder %s13, 0
    %p54 = por %p52, %p53
    %p55 = scmp.ne.s32.totalorder %s47, %s49
    %p56 = scmp.eq.s32.totalorder %s18, 1
    %p57 = por %p55, %p56
    %p58 = scmp.ne.s32.totalorder %s49, %s50
    %p59 = scmp.eq.s32.totalorder %s18, 0
    %p60 = por %p58, %p59
    %p61 = scmp.ne.s32.totalorder %s49, %s50
    %p62 = scmp.eq.s32.totalorder %s19, 1
    %p63 = por %p61, %p62
    %p65 = scmp.ne.s32.totalorder %s50, %s64
    %p66 = scmp.eq.s32.totalorder %s19, 0
    %p67 = por %p65, %p66
    %s69 = sadd.s32 %s68, 1
    %p72 = scmp.eq.s32.totalorder %s13, 1
    %p73 = scmp.ne.s32.totalorder %s68, %s70
    %p74 = scmp.eq.s32.totalorder %s13, 0
    %p75 = por %p73, %p74
    %p76 = scmp.ne.s32.totalorder %s68, %s70
    %p77 = scmp.eq.s32.totalorder %s18, 1
    %p78 = por %p76, %p77
    %p79 = scmp.ne.s32.totalorder %s70, %s71
    %p80 = scmp.eq.s32.totalorder %s18, 0
    %p81 = por %p79, %p80
    %p82 = scmp.ne.s32.totalorder %s70, %s71
    %p83 = scmp.eq.s32.totalorder %s19, 1
    %p84 = por %p82, %p83
    %p86 = scmp.ne.s32.totalorder %s71, %s85
    %p87 = scmp.eq.s32.totalorder %s19, 0
    %p88 = por %p86, %p87
    %s90 = sadd.s32 %s89, 1
    %p93 = scmp.eq.s32.totalorder %s13, 1
    %p94 = scmp.ne.s32.totalorder %s89, %s91
    %p95 = scmp.eq.s32.totalorder %s13, 0
    %p96 = por %p94, %p95
    %p97 = scmp.ne.s32.totalorder %s89, %s91
    %p98 = scmp.eq.s32.totalorder %s18, 1
    %p99 = por %p97, %p98
    %p100 = scmp.ne.s32.totalorder %s91, %s92
    %p101 = scmp.eq.s32.totalorder %s18, 0
    %p102 = por %p100, %p101
    %p103 = scmp.ne.s32.totalorder %s91, %s92
    %p104 = scmp.eq.s32.totalorder %s19, 1
    %p105 = por %p103, %p104
    %p107 = scmp.ne.s32.totalorder %s92, %s106
    %p108 = scmp.eq.s32.totalorder %s19, 0
    %p109 = por %p107, %p108
    %s111 = sadd.s32 %s110, 1
    %p114 = scmp.eq.s32.totalorder %s13, 1
    %p115 = scmp.ne.s32.totalorder %s110, %s112
    %p116 = scmp.eq.s32.totalorder %s13, 0
    %p117 = por %p115, %p116
    %p118 = scmp.ne.s32.totalorder %s110, %s112
    %p119 = scmp.eq.s32.totalorder %s18, 1
    %p120 = por %p118, %p119
    %p121 = scmp.ne.s32.totalorder %s112, %s113
    %p122 = scmp.eq.s32.totalorder %s18, 0
    %p123 = por %p121, %p122
    %p124 = scmp.ne.s32.totalorder %s112, %s113
    %p125 = scmp.eq.s32.totalorder %s19, 1
    %p126 = por %p124, %p125
    %p128 = scmp.ne.s32.totalorder %s113, %s127
    %p129 = scmp.eq.s32.totalorder %s19, 0
    %p130 = por %p128, %p129
    %s132 = sadd.s32 %s131, 1
    %p135 = scmp.eq.s32.totalorder %s13, 1
    %p136 = scmp.ne.s32.totalorder %s131, %s133
    %p137 = scmp.eq.s32.totalorder %s13, 0
    %p138 = por %p136, %p137
    %p139 = scmp.ne.s32.totalorder %s131, %s133
    %p140 = scmp.eq.s32.totalorder %s18, 1
    %p141 = por %p139, %p140
    %p142 = scmp.ne.s32.totalorder %s133, %s134
    %p143 = scmp.eq.s32.totalorder %s18, 0
    %p144 = por %p142, %p143
    %p145 = scmp.ne.s32.totalorder %s133, %s134
    %p146 = scmp.eq.s32.totalorder %s19, 1
    %p147 = por %p145, %p146
    %p149 = scmp.ne.s32.totalorder %s134, %s148
    %p150 = scmp.eq.s32.totalorder %s19, 0
    %p151 = por %p149, %p150
    %s153 = sadd.s32 %s152, 1
    %p156 = scmp.eq.s32.totalorder %s13, 1
    %p157 = scmp.ne.s32.totalorder %s152, %s154
    %p158 = scmp.eq.s32.totalorder %s13, 0
    %p159 = por %p157, %p158
    %p160 = scmp.ne.s32.totalorder %s152, %s154
    %p161 = scmp.eq.s32.totalorder %s18, 1
    %p162 = por %p160, %p161
    %p163 = scmp.ne.s32.totalorder %s154, %s155
    %p164 = scmp.eq.s32.totalorder %s18, 0
    %p165 = por %p163, %p164
    %p166 = scmp.ne.s32.totalorder %s154, %s155
    %p167 = scmp.eq.s32.totalorder %s19, 1
    %p168 = por %p166, %p167
    %p170 = scmp.ne.s32.totalorder %s155, %s169
    %p171 = scmp.eq.s32.totalorder %s19, 0
    %p172 = por %p170, %p171
    %s173 = ssub.s32 %s13, %s20
    %p174 = scmp.eq.s32.totalorder %s173, 0
    %s176 = sadd.s32 %s175, 1
    %s177 = scalar_select %p174, %s175, %s176
    %p180 = pneg %p174
    %p181 = scmp.eq.s32.totalorder %s13, 1
    %p182 = por %p180, %p181
    %p183 = scmp.ne.s32.totalorder %s175, %s178
    %p184 = scmp.eq.s32.totalorder %s13, 0
    %p185 = por %p183, %p184
    %p186 = scmp.ne.s32.totalorder %s175, %s178
    %p187 = scmp.eq.s32.totalorder %s18, 1
    %p188 = por %p186, %p187
    %p189 = scmp.ne.s32.totalorder %s178, %s179
    %p190 = scmp.eq.s32.totalorder %s18, 0
    %p191 = por %p189, %p190
    %p192 = scmp.ne.s32.totalorder %s178, %s179
    %p193 = scmp.eq.s32.totalorder %s19, 1
    %p194 = por %p192, %p193
    %p196 = scmp.ne.s32.totalorder %s179, %s195
    %p197 = scmp.eq.s32.totalorder %s19, 0
    %p198 = por %p196, %p197
    %p199 = scmp.le.s32.totalorder 1, %s13
    %p200 = scmp.lt.s32.totalorder %s13, 3
    %p201 = pnand %p199, %p200
    %p202 = pneg %p201
    // Predicated region
    $region9: #{tpu_custom_call.1} parent=5 // pred_check
      _
    $region10: #{tpu_custom_call.1} parent=5 // pred_check_branch
      %204 = sbr.rel (%p201) target = $region12
    $region11: #{tpu_custom_call.1} parent=5 // pred_region
      %s205 = ssub.s32 %s13, 1
      // Predicated region
      $region13: #{tpu_custom_call.1} parent=11 // pred_check
        %p206 = pneg %p60
      $region14: #{tpu_custom_call.1} parent=11 // pred_check_branch
        %208 = sbr.rel (%p206) target = $region16
      $region15: #{tpu_custom_call.1} parent=11 // pred_region
        _
      $region16: #{tpu_custom_call.1} parent=11 // pred_fallthru
        _
      // Predicated region
      $region17: #{tpu_custom_call.1} parent=11 // pred_check
        %p209 = pneg %p81
      $region18: #{tpu_custom_call.1} parent=11 // pred_check_branch
        %211 = sbr.rel (%p209) target = $region20
      $region19: #{tpu_custom_call.1} parent=11 // pred_region
        _
      $region20: #{tpu_custom_call.1} parent=11 // pred_fallthru
        _
      // Predicated region
      $region21: #{tpu_custom_call.1} parent=11 // pred_check
        %p212 = pneg %p102
      $region22: #{tpu_custom_call.1} parent=11 // pred_check_branch
        %214 = sbr.rel (%p212) target = $region24
      $region23: #{tpu_custom_call.1} parent=11 // pred_region
        _
      $region24: #{tpu_custom_call.1} parent=11 // pred_fallthru
        _
      // Predicated region
      $region25: #{tpu_custom_call.1} parent=11 // pred_check
        %p215 = pneg %p123
      $region26: #{tpu_custom_call.1} parent=11 // pred_check_branch
        %217 = sbr.rel (%p215) target = $region28
      $region27: #{tpu_custom_call.1} parent=11 // pred_region
        _
      $region28: #{tpu_custom_call.1} parent=11 // pred_fallthru
        _
      // Predicated region
      $region29: #{tpu_custom_call.1} parent=11 // pred_check
        %p218 = pneg %p144
      $region30: #{tpu_custom_call.1} parent=11 // pred_check_branch
        %220 = sbr.rel (%p218) target = $region32
      $region31: #{tpu_custom_call.1} parent=11 // pred_region
        _
      $region32: #{tpu_custom_call.1} parent=11 // pred_fallthru
        _
      // Predicated region
      $region33: #{tpu_custom_call.1} parent=11 // pred_check
        %p221 = pneg %p165
      $region34: #{tpu_custom_call.1} parent=11 // pred_check_branch
        %223 = sbr.rel (%p221) target = $region36
      $region35: #{tpu_custom_call.1} parent=11 // pred_region
        _
      $region36: #{tpu_custom_call.1} parent=11 // pred_fallthru
        _
    $region12: #{tpu_custom_call.1} parent=5 // pred_fallthru
      _
    %p224 = scmp.lt.s32.totalorder %s13, 2
    // Predicated region
    $region37: #{tpu_custom_call.1} parent=5 // pred_check
      %p225 = pneg %p224
    $region38: #{tpu_custom_call.1} parent=5 // pred_check_branch
      %227 = sbr.rel (%p225) target = $region40
    $region39: #{tpu_custom_call.1} parent=5 // pred_region
      // Predicated region
      $region41: #{tpu_custom_call.1} parent=39 // pred_check
        %p228 = pneg %p33
      $region42: #{tpu_custom_call.1} parent=39 // pred_check_branch
        %230 = sbr.rel (%p228) target = $region44
      $region43: #{tpu_custom_call.1} parent=39 // pred_region
        %p231 = scmp.lt.s32.totalorder %s13, 1
        %s232 = scalar_select %p231, %s13, 1
        %s233 = smul.addr %s232, 72
        %s234 = smul.addr %s233, 8
        %s235 = scalar_lea.vmem %s0, %s234
      $region44: #{tpu_custom_call.1} parent=39 // pred_fallthru
        _
    $region40: #{tpu_custom_call.1} parent=5 // pred_fallthru
      _
    %p236 = scmp.le.s32.totalorder 1, %s13
    %p237 = scmp.lt.s32.totalorder %s13, 3
    %p238 = pnand %p236, %p237
    %p239 = pneg %p238
    // Predicated region
    $region45: #{tpu_custom_call.1} parent=5 // pred_check
      _
    $region46: #{tpu_custom_call.1} parent=5 // pred_check_branch
      %241 = sbr.rel (%p238) target = $region48
    $region47: #{tpu_custom_call.1} parent=5 // pred_region
      %s242 = ssub.s32 %s13, 1
      %p243 = scmp.lt.s32.totalorder %s18, 1
      %s244 = scalar_select %p243, %s18, 1
      %s245 = smul.addr %s244, 72
      %s246 = smul.addr %s245, 8
      %s247 = scalar_lea.vmem %s0, %s246
      %p248 = pneg %p39
      %p249 = pneg %p36
      %p250 = pneg %p60
      %p251 = pneg %p57
      %p252 = pneg %p81
      %p253 = pneg %p78
      %p254 = pneg %p102
      %p255 = pneg %p99
      %p256 = pneg %p123
      %p257 = pneg %p120
      %p258 = pneg %p144
      %p259 = pneg %p141
      %p260 = pneg %p165
      %p261 = pneg %p162
      %p262 = pneg %p191
      %p263 = pneg %p188
      %p264 = scmp.lt.s32.totalorder %s18, 1
      %s265 = scalar_select %p264, %s18, 1
      %s266 = smul.addr %s265, 8
      %s267 = smul.addr %s266, 8
      %s268 = scalar_lea.vmem %s7, %s267
      %p269 = scmp.lt.s32.totalorder %s18, 1
      %s270 = scalar_select %p269, %s18, 1
      %s271 = smul.addr %s270, 72
      %s272 = smul.addr %s271, 8
      %s273 = scalar_lea.vmem %s0, %s272
      %p274 = scmp.lt.s32.totalorder %s18, 1
      %s275 = scalar_select %p274, %s18, 1
      %s276 = smul.addr %s275, 8
      %s277 = smul.addr %s276, 8
      %s278 = scalar_lea.vmem %s7, %s277
      %v279 = vld [vmem:[%s273] sm:$0xff]
      %v280 = vld [vmem:[%s273 + $0x10] sm:$0xff]
      %v281 = vld [vmem:[%s273 + $0x20] sm:$0xff]
      %v282 = vld [vmem:[%s273 + $0x30] sm:$0xff]
      %v283 = vld [vmem:[%s273 + $0x40] sm:$0xff]
      %v284 = vld [vmem:[%s273 + $0x50] sm:$0xff]
      %v285 = vld [vmem:[%s273 + $0x60] sm:$0xff]
      %v286 = vld [vmem:[%s273 + $0x70] sm:$0xff]
      %s287 = scalar_lea.vmem %s273, 144
      %v288 = vld [vmem:[%s287] sm:$0xff]
      %v289 = vld [vmem:[%s287 + $0x10] sm:$0xff]
      %v290 = vld [vmem:[%s287 + $0x20] sm:$0xff]
      %v291 = vld [vmem:[%s287 + $0x30] sm:$0xff]
      %v292 = vld [vmem:[%s287 + $0x40] sm:$0xff]
      %v293 = vld [vmem:[%s287 + $0x50] sm:$0xff]
      %v294 = vld [vmem:[%s287 + $0x60] sm:$0xff]
      %v295 = vld [vmem:[%s287 + $0x70] sm:$0xff]
      %v296 = vld [vmem:[%s273 + $0x1] sm:$0xff]
      %v297 = vld [vmem:[%s273 + $0x11] sm:$0xff]
      %v298 = vld [vmem:[%s273 + $0x21] sm:$0xff]
      %v299 = vld [vmem:[%s273 + $0x31] sm:$0xff]
      %v300 = vld [vmem:[%s273 + $0x41] sm:$0xff]
      %v301 = vld [vmem:[%s273 + $0x51] sm:$0xff]
      %v302 = vld [vmem:[%s273 + $0x61] sm:$0xff]
      %v303 = vld [vmem:[%s273 + $0x71] sm:$0xff]
      %s304 = scalar_lea.vmem %s273, 288
      %v305 = vld [vmem:[%s304] sm:$0xff]
      %v306 = vld [vmem:[%s304 + $0x10] sm:$0xff]
      %v307 = vld [vmem:[%s304 + $0x20] sm:$0xff]
      %v308 = vld [vmem:[%s304 + $0x30] sm:$0xff]
      %v309 = vld [vmem:[%s304 + $0x40] sm:$0xff]
      %v310 = vld [vmem:[%s304 + $0x50] sm:$0xff]
      %v311 = vld [vmem:[%s304 + $0x60] sm:$0xff]
      %v312 = vld [vmem:[%s304 + $0x70] sm:$0xff]
      %s313 = scalar_lea.vmem %s273, 432
      %v314 = vld [vmem:[%s313] sm:$0xff]
      %v315 = vld [vmem:[%s313 + $0x10] sm:$0xff]
      %v316 = vld [vmem:[%s313 + $0x20] sm:$0xff]
      %v317 = vld [vmem:[%s313 + $0x30] sm:$0xff]
      %v318 = vld [vmem:[%s313 + $0x40] sm:$0xff]
      %v319 = vld [vmem:[%s313 + $0x50] sm:$0xff]
      %v320 = vld [vmem:[%s313 + $0x60] sm:$0xff]
      %v321 = vld [vmem:[%s313 + $0x70] sm:$0xff]
      %v322 = vld [vmem:[%s304 + $0x1] sm:$0xff]
      %v323 = vld [vmem:[%s304 + $0x11] sm:$0xff]
      %v324 = vld [vmem:[%s304 + $0x21] sm:$0xff]
      %v325 = vld [vmem:[%s304 + $0x31] sm:$0xff]
      %v326 = vld [vmem:[%s304 + $0x41] sm:$0xff]
      %v327 = vld [vmem:[%s304 + $0x51] sm:$0xff]
      %v328 = vld [vmem:[%s304 + $0x61] sm:$0xff]
      %v329 = vld [vmem:[%s304 + $0x71] sm:$0xff]
      %s330 = scalar_lea.vmem %s273, 16
      %v331 = vld [vmem:[%s330] sm:$0xff]
      %v332 = vld [vmem:[%s330 + $0x10] sm:$0xff]
      %v333 = vld [vmem:[%s330 + $0x20] sm:$0xff]
      %v334 = vld [vmem:[%s330 + $0x30] sm:$0xff]
      %v335 = vld [vmem:[%s330 + $0x40] sm:$0xff]
      %v336 = vld [vmem:[%s330 + $0x50] sm:$0xff]
      %v337 = vld [vmem:[%s330 + $0x60] sm:$0xff]
      %v338 = vld [vmem:[%s330 + $0x70] sm:$0xff]
      %s339 = scalar_lea.vmem %s273, 160
      %v340 = vld [vmem:[%s339] sm:$0xff]
      %v341 = vld [vmem:[%s339 + $0x10] sm:$0xff]
      %v342 = vld [vmem:[%s339 + $0x20] sm:$0xff]
      %v343 = vld [vmem:[%s339 + $0x30] sm:$0xff]
      %v344 = vld [vmem:[%s339 + $0x40] sm:$0xff]
      %v345 = vld [vmem:[%s339 + $0x50] sm:$0xff]
      %v346 = vld [vmem:[%s339 + $0x60] sm:$0xff]
      %v347 = vld [vmem:[%s339 + $0x70] sm:$0xff]
      %v348 = vld [vmem:[%s330 + $0x1] sm:$0xff]
      %v349 = vld [vmem:[%s330 + $0x11] sm:$0xff]
      %v350 = vld [vmem:[%s330 + $0x21] sm:$0xff]
      %v351 = vld [vmem:[%s330 + $0x31] sm:$0xff]
      %v352 = vld [vmem:[%s330 + $0x41] sm:$0xff]
      %v353 = vld [vmem:[%s330 + $0x51] sm:$0xff]
      %v354 = vld [vmem:[%s330 + $0x61] sm:$0xff]
      %v355 = vld [vmem:[%s330 + $0x71] sm:$0xff]
      %364 = vrot.lane.b32.xlu0 %v288, 4
      %v365 = vpop.permute.xlu0 %364
      %366 = vrot.lane.b32.xlu0 %v289, 4
      %v367 = vpop.permute.xlu0 %366
      %368 = vrot.lane.b32.xlu0 %v290, 4
      %v369 = vpop.permute.xlu0 %368
      %370 = vrot.lane.b32.xlu0 %v291, 4
      %v371 = vpop.permute.xlu0 %370
      %372 = vrot.lane.b32.xlu0 %v292, 4
      %v373 = vpop.permute.xlu0 %372
      %374 = vrot.lane.b32.xlu0 %v293, 4
      %v375 = vpop.permute.xlu0 %374
      %376 = vrot.lane.b32.xlu0 %v294, 4
      %v377 = vpop.permute.xlu0 %376
      %378 = vrot.lane.b32.xlu0 %v295, 4
      %v379 = vpop.permute.xlu0 %378
      %396 = vrot.lane.b32.xlu0 %v296, 8
      %v397 = vpop.permute.xlu0 %396
      %398 = vrot.lane.b32.xlu0 %v297, 8
      %v399 = vpop.permute.xlu0 %398
      %400 = vrot.lane.b32.xlu0 %v298, 8
      %v401 = vpop.permute.xlu0 %400
      %402 = vrot.lane.b32.xlu0 %v299, 8
      %v403 = vpop.permute.xlu0 %402
      %404 = vrot.lane.b32.xlu0 %v300, 8
      %v405 = vpop.permute.xlu0 %404
      %406 = vrot.lane.b32.xlu0 %v301, 8
      %v407 = vpop.permute.xlu0 %406
      %408 = vrot.lane.b32.xlu0 %v302, 8
      %v409 = vpop.permute.xlu0 %408
      %410 = vrot.lane.b32.xlu0 %v303, 8
      %v411 = vpop.permute.xlu0 %410
      %428 = vrot.lane.b32.xlu0 %v305, 12
      %v429 = vpop.permute.xlu0 %428
      %430 = vrot.lane.b32.xlu0 %v306, 12
      %v431 = vpop.permute.xlu0 %430
      %432 = vrot.lane.b32.xlu0 %v307, 12
      %v433 = vpop.permute.xlu0 %432
      %434 = vrot.lane.b32.xlu0 %v308, 12
      %v435 = vpop.permute.xlu0 %434
      %436 = vrot.lane.b32.xlu0 %v309, 12
      %v437 = vpop.permute.xlu0 %436
      %438 = vrot.lane.b32.xlu0 %v310, 12
      %v439 = vpop.permute.xlu0 %438
      %440 = vrot.lane.b32.xlu0 %v311, 12
      %v441 = vpop.permute.xlu0 %440
      %442 = vrot.lane.b32.xlu0 %v312, 12
      %v443 = vpop.permute.xlu0 %442
      %460 = vrot.lane.b32.xlu0 %v314, 16
      %v461 = vpop.permute.xlu0 %460
      %462 = vrot.lane.b32.xlu0 %v315, 16
      %v463 = vpop.permute.xlu0 %462
      %464 = vrot.lane.b32.xlu0 %v316, 16
      %v465 = vpop.permute.xlu0 %464
      %466 = vrot.lane.b32.xlu0 %v317, 16
      %v467 = vpop.permute.xlu0 %466
      %468 = vrot.lane.b32.xlu0 %v318, 16
      %v469 = vpop.permute.xlu0 %468
      %470 = vrot.lane.b32.xlu0 %v319, 16
      %v471 = vpop.permute.xlu0 %470
      %472 = vrot.lane.b32.xlu0 %v320, 16
      %v473 = vpop.permute.xlu0 %472
      %474 = vrot.lane.b32.xlu0 %v321, 16
      %v475 = vpop.permute.xlu0 %474
      %492 = vrot.lane.b32.xlu0 %v322, 20
      %v493 = vpop.permute.xlu0 %492
      %494 = vrot.lane.b32.xlu0 %v323, 20
      %v495 = vpop.permute.xlu0 %494
      %496 = vrot.lane.b32.xlu0 %v324, 20
      %v497 = vpop.permute.xlu0 %496
      %498 = vrot.lane.b32.xlu0 %v325, 20
      %v499 = vpop.permute.xlu0 %498
      %500 = vrot.lane.b32.xlu0 %v326, 20
      %v501 = vpop.permute.xlu0 %500
      %502 = vrot.lane.b32.xlu0 %v327, 20
      %v503 = vpop.permute.xlu0 %502
      %504 = vrot.lane.b32.xlu0 %v328, 20
      %v505 = vpop.permute.xlu0 %504
      %506 = vrot.lane.b32.xlu0 %v329, 20
      %v507 = vpop.permute.xlu0 %506
      %524 = vrot.lane.b32.xlu0 %v331, 24
      %v525 = vpop.permute.xlu0 %524
      %526 = vrot.lane.b32.xlu0 %v332, 24
      %v527 = vpop.permute.xlu0 %526
      %528 = vrot.lane.b32.xlu0 %v333, 24
      %v529 = vpop.permute.xlu0 %528
      %530 = vrot.lane.b32.xlu0 %v334, 24
      %v531 = vpop.permute.xlu0 %530
      %532 = vrot.lane.b32.xlu0 %v335, 24
      %v533 = vpop.permute.xlu0 %532
      %534 = vrot.lane.b32.xlu0 %v336, 24
      %v535 = vpop.permute.xlu0 %534
      %536 = vrot.lane.b32.xlu0 %v337, 24
      %v537 = vpop.permute.xlu0 %536
      %538 = vrot.lane.b32.xlu0 %v338, 24
      %v539 = vpop.permute.xlu0 %538
      %556 = vrot.lane.b32.xlu0 %v340, 28
      %v557 = vpop.permute.xlu0 %556
      %558 = vrot.lane.b32.xlu0 %v341, 28
      %v559 = vpop.permute.xlu0 %558
      %560 = vrot.lane.b32.xlu0 %v342, 28
      %v561 = vpop.permute.xlu0 %560
      %562 = vrot.lane.b32.xlu0 %v343, 28
      %v563 = vpop.permute.xlu0 %562
      %564 = vrot.lane.b32.xlu0 %v344, 28
      %v565 = vpop.permute.xlu0 %564
      %566 = vrot.lane.b32.xlu0 %v345, 28
      %v567 = vpop.permute.xlu0 %566
      %568 = vrot.lane.b32.xlu0 %v346, 28
      %v569 = vpop.permute.xlu0 %568
      %570 = vrot.lane.b32.xlu0 %v347, 28
      %v571 = vpop.permute.xlu0 %570
      %588 = vrot.lane.b32.xlu0 %v348, 32
      %v589 = vpop.permute.xlu0 %588
      %590 = vrot.lane.b32.xlu0 %v349, 32
      %v591 = vpop.permute.xlu0 %590
      %592 = vrot.lane.b32.xlu0 %v350, 32
      %v593 = vpop.permute.xlu0 %592
      %594 = vrot.lane.b32.xlu0 %v351, 32
      %v595 = vpop.permute.xlu0 %594
      %596 = vrot.lane.b32.xlu0 %v352, 32
      %v597 = vpop.permute.xlu0 %596
      %598 = vrot.lane.b32.xlu0 %v353, 32
      %v599 = vpop.permute.xlu0 %598
      %600 = vrot.lane.b32.xlu0 %v354, 32
      %v601 = vpop.permute.xlu0 %600
      %602 = vrot.lane.b32.xlu0 %v355, 32
      %v603 = vpop.permute.xlu0 %602
      %vm612 = vcmask 31744
      %v613 = vsel %vm612, %v279, %v365
      %v614 = vsel %vm612, %v280, %v367
      %v615 = vsel %vm612, %v281, %v369
      %v616 = vsel %vm612, %v282, %v371
      %v617 = vsel %vm612, %v283, %v373
      %v618 = vsel %vm612, %v284, %v375
      %v619 = vsel %vm612, %v285, %v377
      %v620 = vsel %vm612, %v286, %v379
      %vm621 = vcmask 64512
      %v622 = vsel %vm621, %v613, %v397
      %v623 = vsel %vm621, %v614, %v399
      %v624 = vsel %vm621, %v615, %v401
      %v625 = vsel %vm621, %v616, %v403
      %v626 = vsel %vm621, %v617, %v405
      %v627 = vsel %vm621, %v618, %v407
      %v628 = vsel %vm621, %v619, %v409
      %v629 = vsel %vm621, %v620, %v411
      %vm630 = vcmask 97280
      %v631 = vsel %vm630, %v622, %v429
      %v632 = vsel %vm630, %v623, %v431
      %v633 = vsel %vm630, %v624, %v433
      %v634 = vsel %vm630, %v625, %v435
      %v635 = vsel %vm630, %v626, %v437
      %v636 = vsel %vm630, %v627, %v439
      %v637 = vsel %vm630, %v628, %v441
      %v638 = vsel %vm630, %v629, %v443
      %vm639 = vcmask 130048
      %v640 = vsel %vm639, %v631, %v461
      %v641 = vsel %vm639, %v632, %v463
      %v642 = vsel %vm639, %v633, %v465
      %v643 = vsel %vm639, %v634, %v467
      %v644 = vsel %vm639, %v635, %v469
      %v645 = vsel %vm639, %v636, %v471
      %v646 = vsel %vm639, %v637, %v473
      %v647 = vsel %vm639, %v638, %v475
      %vm648 = vcmask 162816
      %v649 = vsel %vm648, %v640, %v493
      %v650 = vsel %vm648, %v641, %v495
      %v651 = vsel %vm648, %v642, %v497
      %v652 = vsel %vm648, %v643, %v499
      %v653 = vsel %vm648, %v644, %v501
      %v654 = vsel %vm648, %v645, %v503
      %v655 = vsel %vm648, %v646, %v505
      %v656 = vsel %vm648, %v647, %v507
      %vm657 = vcmask 195584
      %v658 = vsel %vm657, %v649, %v525
      %v659 = vsel %vm657, %v650, %v527
      %v660 = vsel %vm657, %v651, %v529
      %v661 = vsel %vm657, %v652, %v531
      %v662 = vsel %vm657, %v653, %v533
      %v663 = vsel %vm657, %v654, %v535
      %v664 = vsel %vm657, %v655, %v537
      %v665 = vsel %vm657, %v656, %v539
      %vm666 = vcmask 228352
      %v667 = vsel %vm666, %v658, %v557
      %v668 = vsel %vm666, %v659, %v559
      %v669 = vsel %vm666, %v660, %v561
      %v670 = vsel %vm666, %v661, %v563
      %v671 = vsel %vm666, %v662, %v565
      %v672 = vsel %vm666, %v663, %v567
      %v673 = vsel %vm666, %v664, %v569
      %v674 = vsel %vm666, %v665, %v571
      %vm675 = vcmask 261120
      %v676 = vsel %vm675, %v667, %v589
      %v677 = vsel %vm675, %v668, %v591
      %v678 = vsel %vm675, %v669, %v593
      %v679 = vsel %vm675, %v670, %v595
      %v680 = vsel %vm675, %v671, %v597
      %v681 = vsel %vm675, %v672, %v599
      %v682 = vsel %vm675, %v673, %v601
      %v683 = vsel %vm675, %v674, %v603
      %v684 = vld [vmem:[%s1] sm:$0xff]
      %v685 = vld [vmem:[%s1 + $0x8] sm:$0xff]
      %v686 = vld [vmem:[%s1 + $0x10] sm:$0xff]
      %v687 = vld [vmem:[%s1 + $0x18] sm:$0xff]
      %v688 = vld [vmem:[%s1 + $0x20] sm:$0xf]
      %vm689 = vcmask 293888
      %v691 = vsel %vm689, %v676, 0
      %v694 = vsel %vm689, %v677, 0
      %v697 = vsel %vm689, %v678, 0
      %v700 = vsel %vm689, %v679, 0
      %v703 = vsel %vm689, %v680, 0
      %v706 = vsel %vm689, %v681, 0
      %v709 = vsel %vm689, %v682, 0
      %v712 = vsel %vm689, %v683, 0
      %vm714 = vcmask 1043456
      %v716 = vsel %vm714, %v688, 0
      %718 = vmatprep.subr.mxu0 0.0
      %719 = vmatpush1.msra.mxu0 %v684
      %720 = vmatprep.subr.mxu0 0.0
      %721 = vmatpush1.msra.mxu0 %v685
      %722 = vmatprep.subr.mxu0 0.0
      %723 = vmatpush1.msra.mxu0 %v686
      %724 = vmatprep.subr.mxu0 0.0
      %725 = vmatpush1.msra.mxu0 %v687
      %726 = vmatprep.subr.mxu0 0.0
      %727 = vmatpush1.msra.mxu0 %v716
      %728 = vmatprep.subr.mxu0 0.0
      %729 = vmatpush1.msra.mxu0 0.0
      %730 = vmatprep.subr.mxu0 0.0
      %731 = vmatpush1.msra.mxu0 0.0
      %732 = vmatprep.subr.mxu0 0.0
      %733 = vmatpush1.msra.mxu0 0.0
      %734 = vmatprep.subr.mxu0 0.0
      %735 = vmatpush1.msra.mxu0 0.0
      %736 = vmatprep.subr.mxu0 0.0
      %737 = vmatpush1.msra.mxu0 0.0
      %738 = vmatprep.subr.mxu0 0.0
      %739 = vmatpush1.msra.mxu0 0.0
      %740 = vmatprep.subr.mxu0 0.0
      %741 = vmatpush1.msra.mxu0 0.0
      %742 = vmatprep.subr.mxu0 0.0
      %743 = vmatpush1.msra.mxu0 0.0
      %744 = vmatprep.subr.mxu0 0.0
      %745 = vmatpush1.msra.mxu0 0.0
      %746 = vmatprep.subr.mxu0 0.0
      %747 = vmatpush1.msra.mxu0 0.0
      %748 = vmatprep.subr.mxu0 0.0
      %749 = vmatpush1.msra.mxu0 0.0
      %750 = vmatprep.subr.mxu0 0.0
      %751 = vmatpush1.msra.mxu0 0.0
      %752 = vmatprep.subr.mxu0 0.0
      %753 = vmatpush1.msra.mxu0 0.0
      %754 = vmatprep.subr.mxu0 0.0
      %755 = vmatpush1.msra.mxu0 0.0
      %756 = vmatprep.subr.mxu0 0.0
      %757 = vmatpush1.msra.mxu0 0.0
      %758 = vmatprep.subr.mxu0 0.0
      %759 = vmatpush1.msra.mxu0 0.0
      %760 = vmatprep.subr.mxu0 0.0
      %761 = vmatpush1.msra.mxu0 0.0
      %762 = vmatprep.subr.mxu0 0.0
      %763 = vmatpush1.msra.mxu0 0.0
      %764 = vmatprep.subr.mxu0 0.0
      %765 = vmatpush1.msra.mxu0 0.0
      %766 = vmatprep.subr.mxu0 0.0
      %767 = vmatpush1.msra.mxu0 0.0
      %768 = vmatprep.subr.mxu0 0.0
      %769 = vmatpush1.msra.mxu0 0.0
      %770 = vmatprep.subr.mxu0 0.0
      %771 = vmatpush1.msra.mxu0 0.0
      %772 = vmatprep.subr.mxu0 0.0
      %773 = vmatpush1.msra.mxu0 0.0
      %774 = vmatprep.subr.mxu0 0.0
      %775 = vmatpush1.msra.mxu0 0.0
      %776 = vmatprep.subr.mxu0 0.0
      %777 = vmatpush1.msra.mxu0 0.0
      %778 = vmatprep.subr.mxu0 0.0
      %779 = vmatpush1.msra.mxu0 0.0
      %780 = vmatprep.subr.mxu0 0.0
      %781 = vmatpush1.msra.mxu0 0.0
      %782 = vmatprep.mubr.f32.mxu0 0.0
      %783 = vmatmul.mubr.f32.gmra.mrb[0].mxu0 %v691
      %v784 = vpop.f32.mrb[0].mxu0
      %v785 = vadd.f32 0.0, %v784
      %v786 = vpop.f32.mrb[0].mxu0
      %787 = vmatprep.mubr.f32.mxu0 0.0
      %788 = vmatmul.mubr.f32.gmra.mrb[0].mxu0 %v694
      %v789 = vpop.f32.mrb[0].mxu0
      %v790 = vadd.f32 0.0, %v789
      %v791 = vpop.f32.mrb[0].mxu0
      %792 = vmatprep.mubr.f32.mxu0 0.0
      %793 = vmatmul.mubr.f32.gmra.mrb[0].mxu0 %v697
      %v794 = vpop.f32.mrb[0].mxu0
      %v795 = vadd.f32 0.0, %v794
      %v796 = vpop.f32.mrb[0].mxu0
      %797 = vmatprep.mubr.f32.mxu0 0.0
      %798 = vmatmul.mubr.f32.gmra.mrb[0].mxu0 %v700
      %v799 = vpop.f32.mrb[0].mxu0
      %v800 = vadd.f32 0.0, %v799
      %v801 = vpop.f32.mrb[0].mxu0
      %802 = vmatprep.mubr.f32.mxu0 0.0
      %803 = vmatmul.mubr.f32.gmra.mrb[0].mxu0 %v703
      %v804 = vpop.f32.mrb[0].mxu0
      %v805 = vadd.f32 0.0, %v804
      %v806 = vpop.f32.mrb[0].mxu0
      %807 = vmatprep.mubr.f32.mxu0 0.0
      %808 = vmatmul.mubr.f32.gmra.mrb[0].mxu0 %v706
      %v809 = vpop.f32.mrb[0].mxu0
      %v810 = vadd.f32 0.0, %v809
      %v811 = vpop.f32.mrb[0].mxu0
      %812 = vmatprep.mubr.f32.mxu0 0.0
      %813 = vmatmul.mubr.f32.gmra.mrb[0].mxu0 %v709
      %v814 = vpop.f32.mrb[0].mxu0
      %v815 = vadd.f32 0.0, %v814
      %v816 = vpop.f32.mrb[0].mxu0
      %817 = vmatprep.mubr.f32.mxu0 0.0
      %818 = vmatmul.mubr.f32.gmra.mrb[0].mxu0 %v712
      %v819 = vpop.f32.mrb[0].mxu0
      %v820 = vadd.f32 0.0, %v819
      %v821 = vpop.f32.mrb[0].mxu0
      %822 = vdwg.mxu0
      %v823 = vld [vmem:[%s2] sm:$0x1]
      %v825 = vlaneseq
      %v826 = vshrl.u32 %v825, 7
      %v827 = vsub.s32 0, %v826
      %v828 = vrot.slane %v823, %v827
      %v830 = vmul.f32 %v785, %v828
      %v831 = vmul.f32 %v790, %v828
      %v832 = vmul.f32 %v795, %v828
      %v833 = vmul.f32 %v800, %v828
      %v834 = vmul.f32 %v805, %v828
      %v835 = vmul.f32 %v810, %v828
      %v836 = vmul.f32 %v815, %v828
      %v837 = vmul.f32 %v820, %v828
      %v838 = vld [vmem:[%s3] sm:$0x1]
      %v840 = vlaneseq
      %v841 = vshrl.u32 %v840, 7
      %v842 = vsub.s32 0, %v841
      %v843 = vrot.slane %v838, %v842
      %v845 = vadd.f32 %v830, %v843
      %v846 = vadd.f32 %v831, %v843
      %v847 = vadd.f32 %v832, %v843
      %v848 = vadd.f32 %v833, %v843
      %v849 = vadd.f32 %v834, %v843
      %v850 = vadd.f32 %v835, %v843
      %v851 = vadd.f32 %v836, %v843
      %v852 = vadd.f32 %v837, %v843
      %v853 = vmax.f32 %v845, 0.0
      %v854 = vmax.f32 %v846, 0.0
      %v855 = vmax.f32 %v847, 0.0
      %v856 = vmax.f32 %v848, 0.0
      %v857 = vmax.f32 %v849, 0.0
      %v858 = vmax.f32 %v850, 0.0
      %v859 = vmax.f32 %v851, 0.0
      %v860 = vmax.f32 %v852, 0.0
      %861 = vst.msk [vmem:[#allocation2] sm:$0xff] %vm621, 0.0
      %vm862 = vcmask 58368
      %863 = vst.msk [vmem:[#allocation2 + $0x8] sm:$0x3] %vm862, 0.0
      %864 = vst.msk [vmem:[#allocation2 + $0x10] sm:$0xff] %vm621, 0.0
      %865 = vst.msk [vmem:[#allocation2 + $0x18] sm:$0x3] %vm862, 0.0
      %866 = vst.msk [vmem:[#allocation2 + $0x20] sm:$0xff] %vm621, 0.0
      %867 = vst.msk [vmem:[#allocation2 + $0x28] sm:$0x3] %vm862, 0.0
      %868 = vst.msk [vmem:[#allocation2 + $0x30] sm:$0xff] %vm621, 0.0
      %869 = vst.msk [vmem:[#allocation2 + $0x38] sm:$0x3] %vm862, 0.0
      %870 = vst.msk [vmem:[#allocation2 + $0x40] sm:$0xff] %vm621, 0.0
      %871 = vst.msk [vmem:[#allocation2 + $0x48] sm:$0x3] %vm862, 0.0
      %872 = vst.msk [vmem:[#allocation2 + $0x50] sm:$0xff] %vm621, 0.0
      %873 = vst.msk [vmem:[#allocation2 + $0x58] sm:$0x3] %vm862, 0.0
      %874 = vst.msk [vmem:[#allocation2 + $0x60] sm:$0xff] %vm621, 0.0
      %875 = vst.msk [vmem:[#allocation2 + $0x68] sm:$0x3] %vm862, 0.0
      %876 = vst.msk [vmem:[#allocation2 + $0x70] sm:$0xff] %vm621, 0.0
      %877 = vst.msk [vmem:[#allocation2 + $0x78] sm:$0x3] %vm862, 0.0
      %878 = vst.msk [vmem:[#allocation2 + $0x80] sm:$0xff] %vm621, 0.0
      %879 = vst.msk [vmem:[#allocation2 + $0x88] sm:$0x3] %vm862, 0.0
      %880 = vst.msk [vmem:[#allocation2 + $0x90] sm:$0xff] %vm621, 0.0
      %881 = vst.msk [vmem:[#allocation2 + $0x98] sm:$0x3] %vm862, 0.0
      %s882 = scalar_lea.vmem [#allocation2], 16
      %883 = vst.msk [vmem:[%s882 + $0x1] sm:$0xff] %vm621, %v853
      %884 = vst.msk [vmem:[%s882 + $0x11] sm:$0xff] %vm621, %v854
      %885 = vst.msk [vmem:[%s882 + $0x21] sm:$0xff] %vm621, %v855
      %886 = vst.msk [vmem:[%s882 + $0x31] sm:$0xff] %vm621, %v856
      %887 = vst.msk [vmem:[%s882 + $0x41] sm:$0xff] %vm621, %v857
      %888 = vst.msk [vmem:[%s882 + $0x51] sm:$0xff] %vm621, %v858
      %889 = vst.msk [vmem:[%s882 + $0x61] sm:$0xff] %vm621, %v859
      %890 = vst.msk [vmem:[%s882 + $0x71] sm:$0xff] %vm621, %v860
      %v891 = vld [vmem:[#allocation2] sm:$0xff]
      %v892 = vld [vmem:[#allocation2 + $0x10] sm:$0xff]
      %v893 = vld [vmem:[#allocation2 + $0x20] sm:$0xff]
      %v894 = vld [vmem:[#allocation2 + $0x30] sm:$0xff]
      %v895 = vld [vmem:[#allocation2 + $0x40] sm:$0xff]
      %v896 = vld [vmem:[#allocation2 + $0x50] sm:$0xff]
      %v897 = vld [vmem:[#allocation2 + $0x60] sm:$0xff]
      %v898 = vld [vmem:[#allocation2 + $0x70] sm:$0xff]
      %v899 = vld [vmem:[#allocation2 + $0x1] sm:$0xff]
      %v900 = vld [vmem:[#allocation2 + $0x11] sm:$0xff]
      %v901 = vld [vmem:[#allocation2 + $0x21] sm:$0xff]
      %v902 = vld [vmem:[#allocation2 + $0x31] sm:$0xff]
      %v903 = vld [vmem:[#allocation2 + $0x41] sm:$0xff]
      %v904 = vld [vmem:[#allocation2 + $0x51] sm:$0xff]
      %v905 = vld [vmem:[#allocation2 + $0x61] sm:$0xff]
      %v906 = vld [vmem:[#allocation2 + $0x71] sm:$0xff]
      %v907 = vld [vmem:[#allocation2 + $0x2] sm:$0xff]
      %v908 = vld [vmem:[#allocation2 + $0x12] sm:$0xff]
      %v909 = vld [vmem:[#allocation2 + $0x22] sm:$0xff]
      %v910 = vld [vmem:[#allocation2 + $0x32] sm:$0xff]
      %v911 = vld [vmem:[#allocation2 + $0x42] sm:$0xff]
      %v912 = vld [vmem:[#allocation2 + $0x52] sm:$0xff]
      %v913 = vld [vmem:[#allocation2 + $0x62] sm:$0xff]
      %v914 = vld [vmem:[#allocation2 + $0x72] sm:$0xff]
      %v915 = vld [vmem:[%s882] sm:$0xff]
      %v916 = vld [vmem:[%s882 + $0x10] sm:$0xff]
      %v917 = vld [vmem:[%s882 + $0x20] sm:$0xff]
      %v918 = vld [vmem:[%s882 + $0x30] sm:$0xff]
      %v919 = vld [vmem:[%s882 + $0x40] sm:$0xff]
      %v920 = vld [vmem:[%s882 + $0x50] sm:$0xff]
      %v921 = vld [vmem:[%s882 + $0x60] sm:$0xff]
      %v922 = vld [vmem:[%s882 + $0x70] sm:$0xff]
      %v923 = vld [vmem:[%s882 + $0x1] sm:$0xff]
      %v924 = vld [vmem:[%s882 + $0x11] sm:$0xff]
      %v925 = vld [vmem:[%s882 + $0x21] sm:$0xff]
      %v926 = vld [vmem:[%s882 + $0x31] sm:$0xff]
      %v927 = vld [vmem:[%s882 + $0x41] sm:$0xff]
      %v928 = vld [vmem:[%s882 + $0x51] sm:$0xff]
      %v929 = vld [vmem:[%s882 + $0x61] sm:$0xff]
      %v930 = vld [vmem:[%s882 + $0x71] sm:$0xff]
      %v931 = vld [vmem:[%s882 + $0x2] sm:$0xff]
      %v932 = vld [vmem:[%s882 + $0x12] sm:$0xff]
      %v933 = vld [vmem:[%s882 + $0x22] sm:$0xff]
      %v934 = vld [vmem:[%s882 + $0x32] sm:$0xff]
      %v935 = vld [vmem:[%s882 + $0x42] sm:$0xff]
      %v936 = vld [vmem:[%s882 + $0x52] sm:$0xff]
      %v937 = vld [vmem:[%s882 + $0x62] sm:$0xff]
      %v938 = vld [vmem:[%s882 + $0x72] sm:$0xff]
      %s939 = scalar_lea.vmem [#allocation2], 32
      %v940 = vld [vmem:[%s939] sm:$0xff]
      %v941 = vld [vmem:[%s939 + $0x10] sm:$0xff]
      %v942 = vld [vmem:[%s939 + $0x20] sm:$0xff]
      %v943 = vld [vmem:[%s939 + $0x30] sm:$0xff]
      %v944 = vld [vmem:[%s939 + $0x40] sm:$0xff]
      %v945 = vld [vmem:[%s939 + $0x50] sm:$0xff]
      %v946 = vld [vmem:[%s939 + $0x60] sm:$0xff]
      %v947 = vld [vmem:[%s939 + $0x70] sm:$0xff]
      %v948 = vld [vmem:[%s939 + $0x1] sm:$0xff]
      %v949 = vld [vmem:[%s939 + $0x11] sm:$0xff]
      %v950 = vld [vmem:[%s939 + $0x21] sm:$0xff]
      %v951 = vld [vmem:[%s939 + $0x31] sm:$0xff]
      %v952 = vld [vmem:[%s939 + $0x41] sm:$0xff]
      %v953 = vld [vmem:[%s939 + $0x51] sm:$0xff]
      %v954 = vld [vmem:[%s939 + $0x61] sm:$0xff]
      %v955 = vld [vmem:[%s939 + $0x71] sm:$0xff]
      %v956 = vld [vmem:[%s939 + $0x2] sm:$0xff]
      %v957 = vld [vmem:[%s939 + $0x12] sm:$0xff]
      %v958 = vld [vmem:[%s939 + $0x22] sm:$0xff]
      %v959 = vld [vmem:[%s939 + $0x32] sm:$0xff]
      %v960 = vld [vmem:[%s939 + $0x42] sm:$0xff]
      %v961 = vld [vmem:[%s939 + $0x52] sm:$0xff]
      %v962 = vld [vmem:[%s939 + $0x62] sm:$0xff]
      %v963 = vld [vmem:[%s939 + $0x72] sm:$0xff]
      %972 = vrot.lane.b32.xlu0 %v899, 8
      %v973 = vpop.permute.xlu0 %972
      %974 = vrot.lane.b32.xlu0 %v900, 8
      %v975 = vpop.permute.xlu0 %974
      %976 = vrot.lane.b32.xlu0 %v901, 8
      %v977 = vpop.permute.xlu0 %976
      %978 = vrot.lane.b32.xlu0 %v902, 8
      %v979 = vpop.permute.xlu0 %978
      %980 = vrot.lane.b32.xlu0 %v903, 8
      %v981 = vpop.permute.xlu0 %980
      %982 = vrot.lane.b32.xlu0 %v904, 8
      %v983 = vpop.permute.xlu0 %982
      %984 = vrot.lane.b32.xlu0 %v905, 8
      %v985 = vpop.permute.xlu0 %984
      %986 = vrot.lane.b32.xlu0 %v906, 8
      %v987 = vpop.permute.xlu0 %986
      %1004 = vrot.lane.b32.xlu0 %v907, 16
      %v1005 = vpop.permute.xlu0 %1004
      %1006 = vrot.lane.b32.xlu0 %v908, 16
      %v1007 = vpop.permute.xlu0 %1006
      %1008 = vrot.lane.b32.xlu0 %v909, 16
      %v1009 = vpop.permute.xlu0 %1008
      %1010 = vrot.lane.b32.xlu0 %v910, 16
      %v1011 = vpop.permute.xlu0 %1010
      %1012 = vrot.lane.b32.xlu0 %v911, 16
      %v1013 = vpop.permute.xlu0 %1012
      %1014 = vrot.lane.b32.xlu0 %v912, 16
      %v1015 = vpop.permute.xlu0 %1014
      %1016 = vrot.lane.b32.xlu0 %v913, 16
      %v1017 = vpop.permute.xlu0 %1016
      %1018 = vrot.lane.b32.xlu0 %v914, 16
      %v1019 = vpop.permute.xlu0 %1018
      %1036 = vrot.lane.b32.xlu0 %v915, 24
      %v1037 = vpop.permute.xlu0 %1036
      %1038 = vrot.lane.b32.xlu0 %v916, 24
      %v1039 = vpop.permute.xlu0 %1038
      %1040 = vrot.lane.b32.xlu0 %v917, 24
      %v1041 = vpop.permute.xlu0 %1040
      %1042 = vrot.lane.b32.xlu0 %v918, 24
      %v1043 = vpop.permute.xlu0 %1042
      %1044 = vrot.lane.b32.xlu0 %v919, 24
      %v1045 = vpop.permute.xlu0 %1044
      %1046 = vrot.lane.b32.xlu0 %v920, 24
      %v1047 = vpop.permute.xlu0 %1046
      %1048 = vrot.lane.b32.xlu0 %v921, 24
      %v1049 = vpop.permute.xlu0 %1048
      %1050 = vrot.lane.b32.xlu0 %v922, 24
      %v1051 = vpop.permute.xlu0 %1050
      %1068 = vrot.lane.b32.xlu0 %v923, 32
      %v1069 = vpop.permute.xlu0 %1068
      %1070 = vrot.lane.b32.xlu0 %v924, 32
      %v1071 = vpop.permute.xlu0 %1070
      %1072 = vrot.lane.b32.xlu0 %v925, 32
      %v1073 = vpop.permute.xlu0 %1072
      %1074 = vrot.lane.b32.xlu0 %v926, 32
      %v1075 = vpop.permute.xlu0 %1074
      %1076 = vrot.lane.b32.xlu0 %v927, 32
      %v1077 = vpop.permute.xlu0 %1076
      %1078 = vrot.lane.b32.xlu0 %v928, 32
      %v1079 = vpop.permute.xlu0 %1078
      %1080 = vrot.lane.b32.xlu0 %v929, 32
      %v1081 = vpop.permute.xlu0 %1080
      %1082 = vrot.lane.b32.xlu0 %v930, 32
      %v1083 = vpop.permute.xlu0 %1082
      %1100 = vrot.lane.b32.xlu0 %v931, 40
      %v1101 = vpop.permute.xlu0 %1100
      %1102 = vrot.lane.b32.xlu0 %v932, 40
      %v1103 = vpop.permute.xlu0 %1102
      %1104 = vrot.lane.b32.xlu0 %v933, 40
      %v1105 = vpop.permute.xlu0 %1104
      %1106 = vrot.lane.b32.xlu0 %v934, 40
      %v1107 = vpop.permute.xlu0 %1106
      %1108 = vrot.lane.b32.xlu0 %v935, 40
      %v1109 = vpop.permute.xlu0 %1108
      %1110 = vrot.lane.b32.xlu0 %v936, 40
      %v1111 = vpop.permute.xlu0 %1110
      %1112 = vrot.lane.b32.xlu0 %v937, 40
      %v1113 = vpop.permute.xlu0 %1112
      %1114 = vrot.lane.b32.xlu0 %v938, 40
      %v1115 = vpop.permute.xlu0 %1114
      %1132 = vrot.lane.b32.xlu0 %v940, 48
      %v1133 = vpop.permute.xlu0 %1132
      %1134 = vrot.lane.b32.xlu0 %v941, 48
      %v1135 = vpop.permute.xlu0 %1134
      %1136 = vrot.lane.b32.xlu0 %v942, 48
      %v1137 = vpop.permute.xlu0 %1136
      %1138 = vrot.lane.b32.xlu0 %v943, 48
      %v1139 = vpop.permute.xlu0 %1138
      %1140 = vrot.lane.b32.xlu0 %v944, 48
      %v1141 = vpop.permute.xlu0 %1140
      %1142 = vrot.lane.b32.xlu0 %v945, 48
      %v1143 = vpop.permute.xlu0 %1142
      %1144 = vrot.lane.b32.xlu0 %v946, 48
      %v1145 = vpop.permute.xlu0 %1144
      %1146 = vrot.lane.b32.xlu0 %v947, 48
      %v1147 = vpop.permute.xlu0 %1146
      %1164 = vrot.lane.b32.xlu0 %v948, 56
      %v1165 = vpop.permute.xlu0 %1164
      %1166 = vrot.lane.b32.xlu0 %v949, 56
      %v1167 = vpop.permute.xlu0 %1166
      %1168 = vrot.lane.b32.xlu0 %v950, 56
      %v1169 = vpop.permute.xlu0 %1168
      %1170 = vrot.lane.b32.xlu0 %v951, 56
      %v1171 = vpop.permute.xlu0 %1170
      %1172 = vrot.lane.b32.xlu0 %v952, 56
      %v1173 = vpop.permute.xlu0 %1172
      %1174 = vrot.lane.b32.xlu0 %v953, 56
      %v1175 = vpop.permute.xlu0 %1174
      %1176 = vrot.lane.b32.xlu0 %v954, 56
      %v1177 = vpop.permute.xlu0 %1176
      %1178 = vrot.lane.b32.xlu0 %v955, 56
      %v1179 = vpop.permute.xlu0 %1178
      %1196 = vrot.lane.b32.xlu0 %v956, 64
      %v1197 = vpop.permute.xlu0 %1196
      %1198 = vrot.lane.b32.xlu0 %v957, 64
      %v1199 = vpop.permute.xlu0 %1198
      %1200 = vrot.lane.b32.xlu0 %v958, 64
      %v1201 = vpop.permute.xlu0 %1200
      %1202 = vrot.lane.b32.xlu0 %v959, 64
      %v1203 = vpop.permute.xlu0 %1202
      %1204 = vrot.lane.b32.xlu0 %v960, 64
      %v1205 = vpop.permute.xlu0 %1204
      %1206 = vrot.lane.b32.xlu0 %v961, 64
      %v1207 = vpop.permute.xlu0 %1206
      %1208 = vrot.lane.b32.xlu0 %v962, 64
      %v1209 = vpop.permute.xlu0 %1208
      %1210 = vrot.lane.b32.xlu0 %v963, 64
      %v1211 = vpop.permute.xlu0 %1210
      %v1220 = vsel %vm621, %v891, %v973
      %v1221 = vsel %vm621, %v892, %v975
      %v1222 = vsel %vm621, %v893, %v977
      %v1223 = vsel %vm621, %v894, %v979
      %v1224 = vsel %vm621, %v895, %v981
      %v1225 = vsel %vm621, %v896, %v983
      %v1226 = vsel %vm621, %v897, %v985
      %v1227 = vsel %vm621, %v898, %v987
      %v1228 = vsel %vm639, %v1220, %v1005
      %v1229 = vsel %vm639, %v1221, %v1007
      %v1230 = vsel %vm639, %v1222, %v1009
      %v1231 = vsel %vm639, %v1223, %v1011
      %v1232 = vsel %vm639, %v1224, %v1013
      %v1233 = vsel %vm639, %v1225, %v1015
      %v1234 = vsel %vm639, %v1226, %v1017
      %v1235 = vsel %vm639, %v1227, %v1019
      %v1236 = vsel %vm657, %v1228, %v1037
      %v1237 = vsel %vm657, %v1229, %v1039
      %v1238 = vsel %vm657, %v1230, %v1041
      %v1239 = vsel %vm657, %v1231, %v1043
      %v1240 = vsel %vm657, %v1232, %v1045
      %v1241 = vsel %vm657, %v1233, %v1047
      %v1242 = vsel %vm657, %v1234, %v1049
      %v1243 = vsel %vm657, %v1235, %v1051
      %v1244 = vsel %vm675, %v1236, %v1069
      %v1245 = vsel %vm675, %v1237, %v1071
      %v1246 = vsel %vm675, %v1238, %v1073
      %v1247 = vsel %vm675, %v1239, %v1075
      %v1248 = vsel %vm675, %v1240, %v1077
      %v1249 = vsel %vm675, %v1241, %v1079
      %v1250 = vsel %vm675, %v1242, %v1081
      %v1251 = vsel %vm675, %v1243, %v1083
      %vm1252 = vcmask 326656
      %v1253 = vsel %vm1252, %v1244, %v1101
      %v1254 = vsel %vm1252, %v1245, %v1103
      %v1255 = vsel %vm1252, %v1246, %v1105
      %v1256 = vsel %vm1252, %v1247, %v1107
      %v1257 = vsel %vm1252, %v1248, %v1109
      %v1258 = vsel %vm1252, %v1249, %v1111
      %v1259 = vsel %vm1252, %v1250, %v1113
      %v1260 = vsel %vm1252, %v1251, %v1115
      %vm1261 = vcmask 392192
      %v1262 = vsel %vm1261, %v1253, %v1133
      %v1263 = vsel %vm1261, %v1254, %v1135
      %v1264 = vsel %vm1261, %v1255, %v1137
      %v1265 = vsel %vm1261, %v1256, %v1139
      %v1266 = vsel %vm1261, %v1257, %v1141
      %v1267 = vsel %vm1261, %v1258, %v1143
      %v1268 = vsel %vm1261, %v1259, %v1145
      %v1269 = vsel %vm1261, %v1260, %v1147
      %vm1270 = vcmask 457728
      %v1271 = vsel %vm1270, %v1262, %v1165
      %v1272 = vsel %vm1270, %v1263, %v1167
      %v1273 = vsel %vm1270, %v1264, %v1169
      %v1274 = vsel %vm1270, %v1265, %v1171
      %v1275 = vsel %vm1270, %v1266, %v1173
      %v1276 = vsel %vm1270, %v1267, %v1175
      %v1277 = vsel %vm1270, %v1268, %v1177
      %v1278 = vsel %vm1270, %v1269, %v1179
      %vm1279 = vcmask 523264
      %v1280 = vsel %vm1279, %v1271, %v1197
      %v1281 = vsel %vm1279, %v1272, %v1199
      %v1282 = vsel %vm1279, %v1273, %v1201
      %v1283 = vsel %vm1279, %v1274, %v1203
      %v1284 = vsel %vm1279, %v1275, %v1205
      %v1285 = vsel %vm1279, %v1276, %v1207
      %v1286 = vsel %vm1279, %v1277, %v1209
      %v1287 = vsel %vm1279, %v1278, %v1211
      %v1288 = vld [vmem:[%s4] sm:$0xff]
      %v1289 = vld [vmem:[%s4 + $0x8] sm:$0xff]
      %v1290 = vld [vmem:[%s4 + $0x10] sm:$0xff]
      %v1291 = vld [vmem:[%s4 + $0x18] sm:$0xff]
      %v1292 = vld [vmem:[%s4 + $0x20] sm:$0xff]
      %v1293 = vld [vmem:[%s4 + $0x28] sm:$0xff]
      %v1294 = vld [vmem:[%s4 + $0x30] sm:$0xff]
      %v1295 = vld [vmem:[%s4 + $0x38] sm:$0xff]
      %v1296 = vld [vmem:[%s4 + $0x40] sm:$0xff]
      %vm1297 = vcmask 588800
      %v1299 = vsel %vm1297, %v1280, 0
      %v1302 = vsel %vm1297, %v1281, 0
      %v1305 = vsel %vm1297, %v1282, 0
      %v1308 = vsel %vm1297, %v1283, 0
      %v1311 = vsel %vm1297, %v1284, 0
      %v1314 = vsel %vm1297, %v1285, 0
      %v1317 = vsel %vm1297, %v1286, 0
      %v1320 = vsel %vm1297, %v1287, 0
      %1322 = vmatprep.subr.mxu0 0.0
      %1323 = vmatpush1.msra.mxu0 %v1288
      %1324 = vmatprep.subr.mxu0 0.0
      %1325 = vmatpush1.msra.mxu0 %v1289
      %1326 = vmatprep.subr.mxu0 0.0
      %1327 = vmatpush1.msra.mxu0 %v1290
      %1328 = vmatprep.subr.mxu0 0.0
      %1329 = vmatpush1.msra.mxu0 %v1291
      %1330 = vmatprep.subr.mxu0 0.0
      %1331 = vmatpush1.msra.mxu0 %v1292
      %1332 = vmatprep.subr.mxu0 0.0
      %1333 = vmatpush1.msra.mxu0 %v1293
      %1334 = vmatprep.subr.mxu0 0.0
      %1335 = vmatpush1.msra.mxu0 %v1294
      %1336 = vmatprep.subr.mxu0 0.0
      %1337 = vmatpush1.msra.mxu0 %v1295
      %1338 = vmatprep.subr.mxu0 0.0
      %1339 = vmatpush1.msra.mxu0 %v1296
      %1340 = vmatprep.subr.mxu0 0.0
      %1341 = vmatpush1.msra.mxu0 0.0
      %1342 = vmatprep.subr.mxu0 0.0
      %1343 = vmatpush1.msra.mxu0 0.0
      %1344 = vmatprep.subr.mxu0 0.0
      %1345 = vmatpush1.msra.mxu0 0.0
      %1346 = vmatprep.subr.mxu0 0.0
      %1347 = vmatpush1.msra.mxu0 0.0
      %1348 = vmatprep.subr.mxu0 0.0
      %1349 = vmatpush1.msra.mxu0 0.0
      %1350 = vmatprep.subr.mxu0 0.0
      %1351 = vmatpush1.msra.mxu0 0.0
      %1352 = vmatprep.subr.mxu0 0.0
      %1353 = vmatpush1.msra.mxu0 0.0
      %1354 = vmatprep.subr.mxu0 0.0
      %1355 = vmatpush1.msra.mxu0 0.0
      %1356 = vmatprep.subr.mxu0 0.0
      %1357 = vmatpush1.msra.mxu0 0.0
      %1358 = vmatprep.subr.mxu0 0.0
      %1359 = vmatpush1.msra.mxu0 0.0
      %1360 = vmatprep.subr.mxu0 0.0
      %1361 = vmatpush1.msra.mxu0 0.0
      %1362 = vmatprep.subr.mxu0 0.0
      %1363 = vmatpush1.msra.mxu0 0.0
      %1364 = vmatprep.subr.mxu0 0.0
      %1365 = vmatpush1.msra.mxu0 0.0
      %1366 = vmatprep.subr.mxu0 0.0
      %1367 = vmatpush1.msra.mxu0 0.0
      %1368 = vmatprep.subr.mxu0 0.0
      %1369 = vmatpush1.msra.mxu0 0.0
      %1370 = vmatprep.subr.mxu0 0.0
      %1371 = vmatpush1.msra.mxu0 0.0
      %1372 = vmatprep.subr.mxu0 0.0
      %1373 = vmatpush1.msra.mxu0 0.0
      %1374 = vmatprep.subr.mxu0 0.0
      %1375 = vmatpush1.msra.mxu0 0.0
      %1376 = vmatprep.subr.mxu0 0.0
      %1377 = vmatpush1.msra.mxu0 0.0
      %1378 = vmatprep.subr.mxu0 0.0
      %1379 = vmatpush1.msra.mxu0 0.0
      %1380 = vmatprep.subr.mxu0 0.0
      %1381 = vmatpush1.msra.mxu0 0.0
      %1382 = vmatprep.subr.mxu0 0.0
      %1383 = vmatpush1.msra.mxu0 0.0
      %1384 = vmatprep.subr.mxu0 0.0
      %1385 = vmatpush1.msra.mxu0 0.0
      %1386 = vmatprep.mubr.f32.mxu0 0.0
      %1387 = vmatmul.mubr.f32.gmra.mrb[0].mxu0 %v1299
      %v1388 = vpop.f32.mrb[0].mxu0
      %v1389 = vadd.f32 0.0, %v1388
      %v1390 = vpop.f32.mrb[0].mxu0
      %1391 = vmatprep.mubr.f32.mxu0 0.0
      %1392 = vmatmul.mubr.f32.gmra.mrb[0].mxu0 %v1302
      %v1393 = vpop.f32.mrb[0].mxu0
      %v1394 = vadd.f32 0.0, %v1393
      %v1395 = vpop.f32.mrb[0].mxu0
      %1396 = vmatprep.mubr.f32.mxu0 0.0
      %1397 = vmatmul.mubr.f32.gmra.mrb[0].mxu0 %v1305
      %v1398 = vpop.f32.mrb[0].mxu0
      %v1399 = vadd.f32 0.0, %v1398
      %v1400 = vpop.f32.mrb[0].mxu0
      %1401 = vmatprep.mubr.f32.mxu0 0.0
      %1402 = vmatmul.mubr.f32.gmra.mrb[0].mxu0 %v1308
      %v1403 = vpop.f32.mrb[0].mxu0
      %v1404 = vadd.f32 0.0, %v1403
      %v1405 = vpop.f32.mrb[0].mxu0
      %1406 = vmatprep.mubr.f32.mxu0 0.0
      %1407 = vmatmul.mubr.f32.gmra.mrb[0].mxu0 %v1311
      %v1408 = vpop.f32.mrb[0].mxu0
      %v1409 = vadd.f32 0.0, %v1408
      %v1410 = vpop.f32.mrb[0].mxu0
      %1411 = vmatprep.mubr.f32.mxu0 0.0
      %1412 = vmatmul.mubr.f32.gmra.mrb[0].mxu0 %v1314
      %v1413 = vpop.f32.mrb[0].mxu0
      %v1414 = vadd.f32 0.0, %v1413
      %v1415 = vpop.f32.mrb[0].mxu0
      %1416 = vmatprep.mubr.f32.mxu0 0.0
      %1417 = vmatmul.mubr.f32.gmra.mrb[0].mxu0 %v1317
      %v1418 = vpop.f32.mrb[0].mxu0
      %v1419 = vadd.f32 0.0, %v1418
      %v1420 = vpop.f32.mrb[0].mxu0
      %1421 = vmatprep.mubr.f32.mxu0 0.0
      %1422 = vmatmul.mubr.f32.gmra.mrb[0].mxu0 %v1320
      %v1423 = vpop.f32.mrb[0].mxu0
      %v1424 = vadd.f32 0.0, %v1423
      %v1425 = vpop.f32.mrb[0].mxu0
      %1426 = vdwg.mxu0
      %v1427 = vld [vmem:[%s5] sm:$0x1]
      %v1429 = vlaneseq
      %v1430 = vshrl.u32 %v1429, 7
      %v1431 = vsub.s32 0, %v1430
      %v1432 = vrot.slane %v1427, %v1431
      %v1434 = vmul.f32 %v1389, %v1432
      %v1435 = vmul.f32 %v1394, %v1432
      %v1436 = vmul.f32 %v1399, %v1432
      %v1437 = vmul.f32 %v1404, %v1432
      %v1438 = vmul.f32 %v1409, %v1432
      %v1439 = vmul.f32 %v1414, %v1432
      %v1440 = vmul.f32 %v1419, %v1432
      %v1441 = vmul.f32 %v1424, %v1432
      %v1442 = vld [vmem:[%s6] sm:$0x1]
      %v1444 = vlaneseq
      %v1445 = vshrl.u32 %v1444, 7
      %v1446 = vsub.s32 0, %v1445
      %v1447 = vrot.slane %v1442, %v1446
      %v1449 = vadd.f32 %v1434, %v1447
      %v1450 = vadd.f32 %v1435, %v1447
      %v1451 = vadd.f32 %v1436, %v1447
      %v1452 = vadd.f32 %v1437, %v1447
      %v1453 = vadd.f32 %v1438, %v1447
      %v1454 = vadd.f32 %v1439, %v1447
      %v1455 = vadd.f32 %v1440, %v1447
      %v1456 = vadd.f32 %v1441, %v1447
      %1457 = vst.msk [vmem:[%s278] sm:$0xff] %vm621, %v1449
      %1458 = vst.msk [vmem:[%s278 + $0x8] sm:$0xff] %vm621, %v1450
      %1459 = vst.msk [vmem:[%s278 + $0x10] sm:$0xff] %vm621, %v1451
      %1460 = vst.msk [vmem:[%s278 + $0x18] sm:$0xff] %vm621, %v1452
      %1461 = vst.msk [vmem:[%s278 + $0x20] sm:$0xff] %vm621, %v1453
      %1462 = vst.msk [vmem:[%s278 + $0x28] sm:$0xff] %vm621, %v1454
      %1463 = vst.msk [vmem:[%s278 + $0x30] sm:$0xff] %vm621, %v1455
      %1464 = vst.msk [vmem:[%s278 + $0x38] sm:$0xff] %vm621, %v1456
      %p1465 = scmp.lt.s32.totalorder %s18, 1
      %s1466 = scalar_select %p1465, %s18, 1
      %s1467 = smul.addr %s1466, 8
      %s1468 = smul.addr %s1467, 8
      %s1469 = scalar_lea.vmem %s7, %s1468
      // Predicated region
      $region49: #{tpu_custom_call.1} parent=47 // pred_check
        %p1470 = pneg %p188
      $region50: #{tpu_custom_call.1} parent=47 // pred_check_branch
        %1472 = sbr.rel (%p1470) target = $region52
      $region51: #{tpu_custom_call.1} parent=47 // pred_region
        _
      $region52: #{tpu_custom_call.1} parent=47 // pred_fallthru
        _
    $region48: #{tpu_custom_call.1} parent=5 // pred_fallthru
      _
    %p1473 = scmp.le.s32.totalorder 2, %s13
    // Predicated region
    $region53: #{tpu_custom_call.1} parent=5 // pred_check
      %p1474 = pneg %p1473
    $region54: #{tpu_custom_call.1} parent=5 // pred_check_branch
      %1476 = sbr.rel (%p1474) target = $region56
    $region55: #{tpu_custom_call.1} parent=5 // pred_region
      %s1477 = ssub.s32 %s13, 2
      // Predicated region
      $region57: #{tpu_custom_call.1} parent=55 // pred_check
        %p1478 = pneg %p194
      $region58: #{tpu_custom_call.1} parent=55 // pred_check_branch
        %1480 = sbr.rel (%p1478) target = $region60
      $region59: #{tpu_custom_call.1} parent=55 // pred_region
        %p1481 = scmp.lt.s32.totalorder %s19, 1
        %s1482 = scalar_select %p1481, %s19, 1
        %s1483 = smul.addr %s1482, 8
        %s1484 = smul.addr %s1483, 8
        %s1485 = scalar_lea.vmem %s7, %s1484
      $region60: #{tpu_custom_call.1} parent=55 // pred_fallthru
        _
    $region56: #{tpu_custom_call.1} parent=5 // pred_fallthru
      _
  $region6: #{tpu_custom_call.1} parent=0 // loop_footer
    %s17 = sadd.s32 1, %s13
  $region7: #{tpu_custom_call.1} parent=0 // loop_footer_branch
    %12 = sbr.rel target = $region3
  $region8: #{tpu_custom_call.1} parent=0 // loop_exit
    _

</llo_original>
